<compile_context>
chip_gen: v7x
topology: tpu7x:2x2x1
jax: 0.10.0
libtpu: 0.0.40
codegen_flags: <defaults>
</compile_context>

<pallas_src>
import jax
import jax.numpy as jnp
from jax.experimental import pallas as pl
from jax.experimental.pallas import tpu as pltpu


def _round_up(n: int, m: int) -> int:
    return (n + m - 1) // m * m


def _vmem_budget_bytes() -> int:
    """Generation-aware VMEM budget with headroom for compiler scratch."""
    cap = None
    try:
        info = pltpu.get_tpu_info()
        cap = int(getattr(info, "vmem_capacity_bytes", 0)) or None
    except Exception:
        cap = None
    if cap is None:
        cap = 64 * 1024 * 1024          # conservative default = v7x per-TC VMEM
    return int(cap * 0.85)              # leave room for internal scratch / spills


_BUFFERED1_OK = None


def _single_buffer_supported() -> bool:
    """One-time tiny compile probe: can constant-index inputs be single-buffered
    via pipeline_mode=pl.Buffered(1)?  (Explicit capability check instead of the
    old broad try/except around the real kernel.)"""
    global _BUFFERED1_OK
    if _BUFFERED1_OK is None:
        ok = False
        if hasattr(pl, "Buffered"):
            try:
                def _k(a_ref, o_ref):
                    o_ref[...] = a_ref[...] + 1.0

                a = jnp.zeros((8, 128), jnp.float32)
                r = pl.pallas_call(
                    _k,
                    out_shape=jax.ShapeDtypeStruct((8, 128), jnp.float32),
                    grid=(2,),
                    in_specs=[pl.BlockSpec((8, 128), lambda i: (0, 0),
                                           pipeline_mode=pl.Buffered(1))],
                    out_specs=pl.BlockSpec((8, 128), lambda i: (0, 0)),
                )(a)
                jax.block_until_ready(r)
                ok = True
            except Exception:
                ok = False
        _BUFFERED1_OK = ok
    return _BUFFERED1_OK


def _pick_bm(B: int, requested: int) -> int:
    """Batch tile: multiple of 16 (bf16 packs 2 rows/sublane); >=2 grid steps
    whenever the batch allows it so v7x's two TensorCores both get work."""
    bm = min(requested, _round_up(B, 16))
    bm = max(16, _round_up(bm, 16))
    if pl.cdiv(B, bm) < 2 and B > 16:
        bm = max(16, _round_up(pl.cdiv(B, 2), 16))
    return bm


# ----------------------------------------------------------------------------
# Parameter preparation (done ONCE, hoisted out of the per-call path)
# ----------------------------------------------------------------------------
def prepare_ae_params(enc_w, enc_b, dec_w, dec_b, *,
                      matmul_dtype=jnp.bfloat16, mode=None):
    """Transpose / pad / cast weights once.

    Zero padding of the hidden dim is inert: padded hidden units see zero
    encoder columns + zero bias -> sigmoid(0)=0.5, but their decoder rows are
    zero, so they contribute nothing to the output.

    mode:
      "resident" - full weights live in VMEM, single batch-tiled grid.
      "tiled"    - weights streamed in K/N slabs (for large item_num); the
                   encoder weight is zero-padded in the item dim so K tiles
                   divide it exactly.
      None       - auto-select from the VMEM budget.
    """
    hidden, item_num = enc_w.shape
    assert dec_w.shape == (item_num, hidden)
    H = _round_up(hidden, 128)
    dsz = jnp.dtype(matmul_dtype).itemsize
    budget = _vmem_budget_bytes()

    if mode is None:
        resident_weight_bytes = 2 * item_num * H * dsz + (H + item_num) * 4
        mode = "resident" if resident_weight_bytes <= budget * 0.5 else "tiled"
    assert mode in ("resident", "tiled")

    be = jnp.zeros((1, H), jnp.float32).at[0, :hidden].set(enc_b.astype(jnp.float32))
    bd = dec_b.astype(jnp.float32).reshape(1, item_num)
    # Decoder weight: hidden padded to H with zero rows, item dim natural width.
    wd_t = jnp.zeros((H, item_num), matmul_dtype).at[:hidden, :].set(
        dec_w.T.astype(matmul_dtype))

    if mode == "resident":
        I = item_num                                     # natural width, no x copy
        we_t = jnp.zeros((item_num, H), matmul_dtype).at[:, :hidden].set(
            enc_w.T.astype(matmul_dtype))
    else:
        I = _round_up(item_num, 128)                     # K tiles divide I exactly
        we_t = jnp.zeros((I, H), matmul_dtype).at[:item_num, :hidden].set(
            enc_w.T.astype(matmul_dtype))

    return dict(mode=mode, we_t=we_t, be=be, wd_t=wd_t, bd=bd,
                item_num=item_num, hidden=hidden, I=I, H=H,
                matmul_dtype=matmul_dtype, vmem_budget=budget)


# ----------------------------------------------------------------------------
# Path A: resident weights (default for small / medium models)
# ----------------------------------------------------------------------------
def _ae_resident_kernel(x_ref, we_t_ref, be_ref, wd_t_ref, bd_ref, o_ref):
    # x_ref:    (bm, item_num) f32 batch tile (cast to bf16 here, not in HBM)
    # we_t_ref: (item_num, H)  bf16 encoder weight, transposed
    # be_ref:   (1, H)         f32  encoder bias
    # wd_t_ref: (H, item_num)  bf16 decoder weight, transposed
    # bd_ref:   (1, item_num)  f32  decoder bias
    x = x_ref[...].astype(we_t_ref.dtype)
    h = jnp.dot(x, we_t_ref[...], preferred_element_type=jnp.float32)
    h = jax.nn.sigmoid(h + be_ref[...])                   # f32 bias + sigmoid (EUP)
    out = jnp.dot(h.astype(wd_t_ref.dtype), wd_t_ref[...],
                  preferred_element_type=jnp.float32)
    o_ref[...] = (out + bd_ref[...]).astype(o_ref.dtype)


def _ae_forward_resident(x, params, bm, out_dtype):
    B, item_num = x.shape
    H = params["H"]
    we_t, be, wd_t, bd = params["we_t"], params["be"], params["wd_t"], params["bd"]
    dsz = jnp.dtype(params["matmul_dtype"]).itemsize
    osz = jnp.dtype(out_dtype).itemsize
    xsz = x.dtype.itemsize

    n_tiles = pl.cdiv(B, bm)

    # Constant-index weight blocks are fetched once (Pallas skips unchanged-block
    # DMAs); single-buffer them when the Pallas version supports it so they only
    # occupy 1x their size in VMEM.
    single_buf = _single_buffer_supported()
    w_kwargs = dict(pipeline_mode=pl.Buffered(1)) if single_buf else {}
    w_copies = 1 if single_buf else 2
    weight_bytes = (we_t.size + wd_t.size) * dsz + (be.size + bd.size) * 4

    vmem_need = (2 * bm * item_num * xsz            # x tiles (double-buffered, f32)
                 + 2 * bm * item_num * osz          # out tiles
                 + w_copies * weight_bytes
                 + bm * (H + item_num) * 4          # f32 intermediates
                 + bm * (H + item_num) * dsz)       # bf16 casts
    vmem_limit = int(min(max(int(1.5 * vmem_need), 32 * 1024 * 1024),
                         params["vmem_budget"]))

    cost = pl.CostEstimate(
        flops=4 * B * item_num * H,
        transcendentals=B * H,
        bytes_accessed=int(B * item_num * (xsz + osz) + weight_bytes))

    return pl.pallas_call(
        _ae_resident_kernel,
        out_shape=jax.ShapeDtypeStruct((B, item_num), out_dtype),
        grid=(n_tiles,),
        in_specs=[
            pl.BlockSpec((bm, item_num), lambda i: (i, 0)),              # x tile
            pl.BlockSpec((item_num, H), lambda i: (0, 0), **w_kwargs),   # enc W^T
            pl.BlockSpec((1, H), lambda i: (0, 0), **w_kwargs),          # enc bias
            pl.BlockSpec((H, item_num), lambda i: (0, 0), **w_kwargs),   # dec W^T
            pl.BlockSpec((1, item_num), lambda i: (0, 0), **w_kwargs),   # dec bias
        ],
        out_specs=pl.BlockSpec((bm, item_num), lambda i: (i, 0)),
        compiler_params=pltpu.CompilerParams(
            dimension_semantics=("parallel",),
            vmem_limit_bytes=vmem_limit),
        cost_estimate=cost,
    )(x, we_t, be, wd_t, bd)


# ----------------------------------------------------------------------------
# Path B: weight streaming (K tiles over the item input dim for the encoder,
# N tiles over decoder output columns) -- for weights that don't fit in VMEM.
# ----------------------------------------------------------------------------
def _ae_forward_tiled(x, params, bm, out_dtype, *, tn=512):
    B, item_num = x.shape
    H, I = params["H"], params["I"]
    we_t, be, wd_t, bd = params["we_t"], params["be"], params["wd_t"], params["bd"]
    mm = params["matmul_dtype"]
    dsz = jnp.dtype(mm).itemsize
    osz = jnp.dtype(out_dtype).itemsize
    xsz = x.dtype.itemsize

    # K tile must divide the padded item width I exactly so every encoder-weight
    # K slab is fully in bounds (real zeros in the padded rows).
    tk = next(t for t in (512, 256, 128) if I % t == 0)
    n_k = I // tk
    tn = min(max(128, _round_up(tn, 128)), _round_up(item_num, 128))
    n_n = pl.cdiv(item_num, tn)
    n_steps = n_k + n_n
    n_b = pl.cdiv(B, bm)

    def kernel(x_ref, we_t_ref, be_ref, wd_t_ref, bd_ref, o_ref, acc_ref, h_ref):
        s = pl.program_id(1)

        @pl.when(s == 0)
        def _init():
            acc_ref[...] = jnp.zeros_like(acc_ref)

        @pl.when(s < n_k)
        def _encode():
            xv = x_ref[...]
            # The K grid runs over the padded width I; the last K block of the
            # (unpadded) x may carry stale VMEM lanes -> mask them to exact 0 so
            # 0 * 0 (padded weight rows) contributes nothing.
            col = jax.lax.broadcasted_iota(jnp.int32, xv.shape, 1) + s * tk
            xv = jnp.where(col < item_num, xv, 0.0).astype(we_t_ref.dtype)
            acc_ref[...] += jnp.dot(xv, we_t_ref[...],
                                    preferred_element_type=jnp.float32)

        @pl.when(s == n_k - 1)
        def _activate():
            h_ref[...] = jax.nn.sigmoid(acc_ref[...] + be_ref[...]).astype(h_ref.dtype)

        @pl.when(s >= n_k)
        def _decode():
            out = jnp.dot(h_ref[...], wd_t_ref[...],
                          preferred_element_type=jnp.float32)
            o_ref[...] = (out + bd_ref[...]).astype(o_ref.dtype)

    # Index maps clamp to the last-used block during the "other" phase, so the
    # corresponding buffer is never re-DMA'd (Pallas skips unchanged blocks).
    x_map = lambda b, s: (b, jnp.minimum(s, n_k - 1))
    we_map = lambda b, s: (jnp.minimum(s, n_k - 1), 0)
    be_map = lambda b, s: (0, 0)
    wd_map = lambda b, s: (0, jnp.maximum(s - n_k, 0))
    bd_map = lambda b, s: (0, jnp.maximum(s - n_k, 0))
    o_map = lambda b, s: (b, jnp.maximum(s - n_k, 0))

    vmem_need = (2 * (bm * tk * xsz + tk * H * dsz + H * tn * dsz + bm * tn * osz)
                 + bm * H * (4 + dsz) + (H + 2 * tn) * 4
                 + bm * max(tk, tn) * 4)
    vmem_limit = int(min(max(int(1.5 * vmem_need), 32 * 1024 * 1024),
                         params["vmem_budget"]))

    cost = pl.CostEstimate(
        flops=4 * B * item_num * H,
        transcendentals=B * H,
        bytes_accessed=int(B * item_num * (xsz + osz)
                           + n_b * (we_t.size + wd_t.size) * dsz
                           + (be.size + bd.size) * 4))

    return pl.pallas_call(
        kernel,
        out_shape=jax.ShapeDtypeStruct((B, item_num), out_dtype),
        grid=(n_b, n_steps),
        in_specs=[
            pl.BlockSpec((bm, tk), x_map),        # x slab (f32, unpadded in HBM)
            pl.BlockSpec((tk, H), we_map),        # enc W^T slab (zero-padded rows)
            pl.BlockSpec((1, H), be_map),         # enc bias
            pl.BlockSpec((H, tn), wd_map),        # dec W^T slab
            pl.BlockSpec((1, tn), bd_map),        # dec bias slab
        ],
        out_specs=pl.BlockSpec((bm, tn), o_map),
        scratch_shapes=[pltpu.VMEM((bm, H), jnp.float32),   # encoder accumulator
                        pltpu.VMEM((bm, H), mm)],           # sigmoid activations
        compiler_params=pltpu.CompilerParams(
            dimension_semantics=("parallel", "arbitrary"),
            vmem_limit_bytes=vmem_limit),
        cost_estimate=cost,
    )(x, we_t, be, wd_t, bd)


# ----------------------------------------------------------------------------
# Public wrappers
# ----------------------------------------------------------------------------
def ae_forward_prepared(x, params, *, bm=None, tn=512, out_dtype=None):
    """x: (B, item_num) f32 -> (B, item_num); same semantics as AE.forward.
    out_dtype defaults to x.dtype (f32, matching the module); pass jnp.bfloat16
    to halve output write traffic / VMEM."""
    B, item_num = x.shape
    assert item_num == params["item_num"]
    if out_dtype is None:
        out_dtype = x.dtype
    if bm is None:
        bm = 512 if (params["mode"] == "tiled" or B >= 4096) else 256
    bm = _pick_bm(B, bm)
    if params["mode"] == "resident":
        return _ae_forward_resident(x, params, bm, out_dtype)
    return _ae_forward_tiled(x, params, bm, out_dtype, tn=tn)


def ae_forward(x, enc_w, enc_b, dec_w, dec_b, *, bm=None,
               matmul_dtype=jnp.bfloat16, out_dtype=None):
    """Convenience path (prefer calling prepare_ae_params once and reusing it)."""
    params = prepare_ae_params(enc_w, enc_b, dec_w, dec_b, matmul_dtype=matmul_dtype)
    return ae_forward_prepared(x, params, bm=bm, out_dtype=out_dtype)


def ae_forward_ref(x, enc_w, enc_b, dec_w, dec_b):
    h = jax.nn.sigmoid(x @ enc_w.T + enc_b)
    return h @ dec_w.T + dec_b


if __name__ == "__main__":
    # Small shapes consistent with the module; deliberately NOT 128-aligned to
    # exercise the unaligned/full-dim and masked-edge paths:
    #   item_num=300, hidden_neuron=100, batch=200.
    item_num = 300
    hidden_neuron = 100
    batch = 200

    key = jax.random.PRNGKey(0)
    k_x, k_we, k_be, k_wd, k_bd = jax.random.split(key, 5)

    # Deterministic parameter init mirroring __init__ (normal std=0.03 weights,
    # PyTorch-default uniform biases).
    enc_w = 0.03 * jax.random.normal(k_we, (hidden_neuron, item_num), jnp.float32)
    dec_w = 0.03 * jax.random.normal(k_wd, (item_num, hidden_neuron), jnp.float32)
    enc_b = jax.random.uniform(k_be, (hidden_neuron,), jnp.float32,
                               minval=-1.0 / item_num ** 0.5,
                               maxval=1.0 / item_num ** 0.5)
    dec_b = jax.random.uniform(k_bd, (item_num,), jnp.float32,
                               minval=-1.0 / hidden_neuron ** 0.5,
                               maxval=1.0 / hidden_neuron ** 0.5)

    # Input: user-item interaction rows (ratings-like values).
    x = jax.random.uniform(k_x, (batch, item_num), jnp.float32,
                           minval=0.0, maxval=5.0)

    ref = ae_forward_ref(x, enc_w, enc_b, dec_w, dec_b)

    # Path A: resident weights (auto-selected at these sizes).
    params = prepare_ae_params(enc_w, enc_b, dec_w, dec_b)
    out = jax.block_until_ready(ae_forward_prepared(x, params))
    assert out.shape == (batch, item_num)
    # bf16 matmuls (f32 accumulation) vs f32 reference -> loosened tolerance.
    assert jnp.allclose(out, ref, atol=2e-2, rtol=2e-2), "resident path mismatch"

    # Path B: weight-streaming K/N-tiled path, forced at small shapes (small
    # bm/tn so the K, N and batch edge cases are all exercised).
    params_t = prepare_ae_params(enc_w, enc_b, dec_w, dec_b, mode="tiled")
    out_t = jax.block_until_ready(ae_forward_prepared(x, params_t, bm=64, tn=128))
    assert out_t.shape == (batch, item_num)
    assert jnp.allclose(out_t, ref, atol=2e-2, rtol=2e-2), "tiled path mismatch"

    print("KERNEL_OK")
</pallas_src>

<mosaic_0001>
module attributes {stable_mosaic.version = 11 : i64} {
  func.func @_k(%arg0: i32, %arg1: memref<8x128xf32, #tpu.memory_space<vmem>>, %arg2: memref<8x128xf32, #tpu.memory_space<vmem>>) attributes {dimension_semantics = [#tpu.dimension_semantics<arbitrary>], iteration_bounds = array<i64: 2>, scalar_prefetch = 0 : i64, scratch_operands = 0 : i64, tpu.core_type = #tpu.core_type<tc>, window_params = [{pipeline_mode = #tpu.pipeline_mode<synchronous>, transform_indices = @transform_0, window_bounds = array<i64: 8, 128>}, {pipeline_mode = #tpu.pipeline_mode<synchronous>, transform_indices = @transform_1, window_bounds = array<i64: 8, 128>}]} {
    %c0 = arith.constant 0 : index
    %c0_0 = arith.constant 0 : index
    %0 = vector.load %arg1[%c0, %c0_0] : memref<8x128xf32, #tpu.memory_space<vmem>>, vector<8x128xf32>
    %cst = arith.constant 1.000000e+00 : f32
    %1 = vector.broadcast %cst : f32 to vector<8x128xf32>
    %2 = arith.addf %0, %1 : vector<8x128xf32>
    %c0_1 = arith.constant 0 : index
    %c0_2 = arith.constant 0 : index
    %3 = vector.load %arg2[%c0_1, %c0_2] : memref<8x128xf32, #tpu.memory_space<vmem>>, vector<8x128xf32>
    tpu.vector_store %arg2[%c0_1, %c0_2], %2 {strides = array<i32>} : memref<8x128xf32, #tpu.memory_space<vmem>>, vector<8x128xf32>,
    return
  }
  func.func @transform_0(%arg0: i32) -> (i32, i32) {
    %c0_i32 = arith.constant 0 : i32
    %c0_i32_0 = arith.constant 0 : i32
    %c0_i32_1 = arith.constant 0 : i32
    return %c0_i32, %c0_i32_0 : i32, i32
  }
  func.func @transform_1(%arg0: i32) -> (i32, i32) {
    %c0_i32 = arith.constant 0 : i32
    %c0_i32_0 = arith.constant 0 : i32
    %c0_i32_1 = arith.constant 0 : i32
    return %c0_i32, %c0_i32_0 : i32, i32
  }
}

module attributes {stable_mosaic.version = 11 : i64} {
  func.func @_ae_resident_kernel(%arg0: i32, %arg1: memref<112x300xf32, #tpu.memory_space<vmem>>, %arg2: memref<300x128xbf16, #tpu.memory_space<vmem>>, %arg3: memref<1x128xf32, #tpu.memory_space<vmem>>, %arg4: memref<128x300xbf16, #tpu.memory_space<vmem>>, %arg5: memref<1x300xf32, #tpu.memory_space<vmem>>, %arg6: memref<112x300xf32, #tpu.memory_space<vmem>>) attributes {dimension_semantics = [#tpu.dimension_semantics<parallel>], iteration_bounds = array<i64: 2>, scalar_prefetch = 0 : i64, scratch_operands = 0 : i64, tpu.core_type = #tpu.core_type<tc>, window_params = [{transform_indices = @transform_0, window_bounds = array<i64: 112, 300>}, {pipeline_mode = #tpu.pipeline_mode<synchronous>, transform_indices = @transform_1, window_bounds = array<i64: 300, 128>}, {pipeline_mode = #tpu.pipeline_mode<synchronous>, transform_indices = @transform_2, window_bounds = array<i64: 1, 128>}, {pipeline_mode = #tpu.pipeline_mode<synchronous>, transform_indices = @transform_3, window_bounds = array<i64: 128, 300>}, {pipeline_mode = #tpu.pipeline_mode<synchronous>, transform_indices = @transform_4, window_bounds = array<i64: 1, 300>}, {transform_indices = @transform_5, window_bounds = array<i64: 112, 300>}]} {
    %c0 = arith.constant 0 : index
    %c0_0 = arith.constant 0 : index
    %0 = vector.load %arg1[%c0, %c0_0] : memref<112x300xf32, #tpu.memory_space<vmem>>, vector<112x300xf32>
    %1 = arith.truncf %0 : vector<112x300xf32> to vector<112x300xbf16>
    %c0_1 = arith.constant 0 : index
    %c0_2 = arith.constant 0 : index
    %2 = vector.load %arg2[%c0_1, %c0_2] : memref<300x128xbf16, #tpu.memory_space<vmem>>, vector<300x128xbf16>
    %cst = arith.constant dense<0.000000e+00> : vector<112x128xf32>
    %3 = tpu.matmul %1, %2, %cst {dimension_numbers = #tpu.dot_dimension_numbers<[1], [0], [0], [1], [0, 0, 1, 1], [], []>} : vector<112x300xbf16>, vector<300x128xbf16>, vector<112x128xf32> -> vector<112x128xf32>
    %c0_3 = arith.constant 0 : index
    %c0_4 = arith.constant 0 : index
    %4 = vector.load %arg3[%c0_3, %c0_4] : memref<1x128xf32, #tpu.memory_space<vmem>>, vector<1x128xf32>
    %5 = vector.broadcast %4 : vector<1x128xf32> to vector<112x128xf32>
    %6 = arith.addf %3, %5 : vector<112x128xf32>
    %7 = arith.negf %6 : vector<112x128xf32>
    %8 = math.exp %7 : vector<112x128xf32>
    %cst_5 = arith.constant 1.000000e+00 : f32
    %9 = vector.broadcast %cst_5 : f32 to vector<112x128xf32>
    %10 = arith.addf %9, %8 : vector<112x128xf32>
    %11 = arith.divf %9, %10 : vector<112x128xf32>
    %12 = arith.truncf %11 : vector<112x128xf32> to vector<112x128xbf16>
    %c0_6 = arith.constant 0 : index
    %c0_7 = arith.constant 0 : index
    %13 = vector.load %arg4[%c0_6, %c0_7] : memref<128x300xbf16, #tpu.memory_space<vmem>>, vector<128x300xbf16>
    %cst_8 = arith.constant dense<0.000000e+00> : vector<112x300xf32>
    %14 = tpu.matmul %12, %13, %cst_8 {dimension_numbers = #tpu.dot_dimension_numbers<[1], [0], [0], [1], [0, 0, 1, 1], [], []>} : vector<112x128xbf16>, vector<128x300xbf16>, vector<112x300xf32> -> vector<112x300xf32>
    %c0_9 = arith.constant 0 : index
    %c0_10 = arith.constant 0 : index
    %15 = vector.load %arg5[%c0_9, %c0_10] : memref<1x300xf32, #tpu.memory_space<vmem>>, vector<1x300xf32>
    %16 = vector.broadcast %15 : vector<1x300xf32> to vector<112x300xf32>
    %17 = arith.addf %14, %16 : vector<112x300xf32>
    %c0_11 = arith.constant 0 : index
    %c0_12 = arith.constant 0 : index
    %18 = vector.load %arg6[%c0_11, %c0_12] : memref<112x300xf32, #tpu.memory_space<vmem>>, vector<112x300xf32>
    tpu.vector_store %arg6[%c0_11, %c0_12], %17 {strides = array<i32>} : memref<112x300xf32, #tpu.memory_space<vmem>>, vector<112x300xf32>,
    return
  }
  func.func @transform_0(%arg0: i32) -> (i32, i32) {
    %c0_i32 = arith.constant 0 : i32
    %c0_i32_0 = arith.constant 0 : i32
    return %arg0, %c0_i32 : i32, i32
  }
  func.func @transform_1(%arg0: i32) -> (i32, i32) {
    %c0_i32 = arith.constant 0 : i32
    %c0_i32_0 = arith.constant 0 : i32
    %c0_i32_1 = arith.constant 0 : i32
    return %c0_i32, %c0_i32_0 : i32, i32
  }
  func.func @transform_2(%arg0: i32) -> (i32, i32) {
    %c0_i32 = arith.constant 0 : i32
    %c0_i32_0 = arith.constant 0 : i32
    %c0_i32_1 = arith.constant 0 : i32
    return %c0_i32, %c0_i32_0 : i32, i32
  }
  func.func @transform_3(%arg0: i32) -> (i32, i32) {
    %c0_i32 = arith.constant 0 : i32
    %c0_i32_0 = arith.constant 0 : i32
    %c0_i32_1 = arith.constant 0 : i32
    return %c0_i32, %c0_i32_0 : i32, i32
  }
  func.func @transform_4(%arg0: i32) -> (i32, i32) {
    %c0_i32 = arith.constant 0 : i32
    %c0_i32_0 = arith.constant 0 : i32
    %c0_i32_1 = arith.constant 0 : i32
    return %c0_i32, %c0_i32_0 : i32, i32
  }
  func.func @transform_5(%arg0: i32) -> (i32, i32) {
    %c0_i32 = arith.constant 0 : i32
    %c0_i32_0 = arith.constant 0 : i32
    return %arg0, %c0_i32 : i32, i32
  }
}

</mosaic_0001>

<llo_original>
// kernel: tpu_custom_call.1
$region0: #{tpu_custom_call.1}
  #allocation0 [shape = 'u32[]', space=smem, size = 0x4, offset = 0x4, fixed_abs, tag = 'smem constant byte address 0x4 - core index']
  #allocation1 [shape = 'u32[144,128]{1,0:T(1,128)}', space=vmem, size = 0x12000, scoped, tag = 'internal scratch']
  %s0 = inlined_call_operand.hbm [shape: f32[8,128], index: 0, kind: input, shape index: {}]
  %s1 = inlined_call_operand.hbm [shape: f32[8,128], index: 1, kind: output, shape index: {}]
  %s2 = sld [smem:[#allocation0]]
  $region41: #{tpu_custom_call.1} parent=0
    _
  %s4 = ssub.s32 1, %s2
  %s5 = scalar_select 0, %s4, %s2
  $region1: #{tpu_custom_call.1} parent=0
    #allocation2 [shape = 'u8[4096]{0}', space=vmem, size = 0x1000, scoped, tag = 'input window, operand 0, single buffered']
    #allocation3 [shape = 's32[2]{0}', space=sflag, size = 0x8, scoped, tag = 'scoped memory for tpu_custom_call.1']
    #allocation4 [shape = 's32[2]{0}', space=sflag, size = 0x8, scoped, tag = 'scoped memory for tpu_custom_call.1']
    #allocation5 [shape = 'u8[4096]{0}', space=vmem, size = 0x1000, scoped, tag = 'output window, operand 0, single buffered']
    %6 = vsyncpa [#allocation3], 0
    %7 = vsyncpa [#allocation4], 0
    loop: start=0, step=1, limit=4
    $region2: #{tpu_custom_call.1} parent=1 // loop_pre_header
      _
    $region3: #{tpu_custom_call.1} parent=1 // loop_header
      %s9 = sphi 0, %s13
      %p10 = scmp.ge.s32.totalorder %s9, 4
      %s17 = sphi 0, %s17
      %s19 = sphi 0, %s17
      %s20 = sphi 0, %s19
      %s34 = sphi 0, %s20
      %s38 = sphi 0, %s38
      %s40 = sphi 0, %s38
      %s41 = sphi 0, %s40
      %s55 = sphi 0, %s41
    $region4: #{tpu_custom_call.1} parent=1 // loop_header_branch
      %12 = sbr.rel (%p10) target = $region8
    $region5: #{tpu_custom_call.1} parent=1 // loop_body
      %s14 = ssub.s32 %s9, 1
      %s15 = ssub.s32 %s9, 2
      %s16 = sadd.s32 %s9, 1
      %s18 = sadd.s32 %s17, 1
      %p21 = scmp.eq.s32.totalorder %s9, 1
      %p22 = scmp.ne.s32.totalorder %s17, %s19
      %p23 = scmp.eq.s32.totalorder %s9, 0
      %p24 = por %p22, %p23
      %p25 = scmp.ne.s32.totalorder %s17, %s19
      %p26 = scmp.eq.s32.totalorder %s14, 1
      %p27 = por %p25, %p26
      %p28 = scmp.ne.s32.totalorder %s19, %s20
      %p29 = scmp.eq.s32.totalorder %s14, 0
      %p30 = por %p28, %p29
      %p31 = scmp.ne.s32.totalorder %s19, %s20
      %p32 = scmp.eq.s32.totalorder %s15, 1
      %p33 = por %p31, %p32
      %p35 = scmp.ne.s32.totalorder %s20, %s34
      %p36 = scmp.eq.s32.totalorder %s15, 0
      %p37 = por %p35, %p36
      %s39 = sadd.s32 %s38, 1
      %p42 = scmp.eq.s32.totalorder %s9, 1
      %p43 = scmp.ne.s32.totalorder %s38, %s40
      %p44 = scmp.eq.s32.totalorder %s9, 0
      %p45 = por %p43, %p44
      %p46 = scmp.ne.s32.totalorder %s38, %s40
      %p47 = scmp.eq.s32.totalorder %s14, 1
      %p48 = por %p46, %p47
      %p49 = scmp.ne.s32.totalorder %s40, %s41
      %p50 = scmp.eq.s32.totalorder %s14, 0
      %p51 = por %p49, %p50
      %p52 = scmp.ne.s32.totalorder %s40, %s41
      %p53 = scmp.eq.s32.totalorder %s15, 1
      %p54 = por %p52, %p53
      %p56 = scmp.ne.s32.totalorder %s41, %s55
      %p57 = scmp.eq.s32.totalorder %s15, 0
      %p58 = por %p56, %p57
      %p59 = scmp.le.s32.totalorder 1, %s9
      %p60 = scmp.lt.s32.totalorder %s9, 3
      %p61 = pnand %p59, %p60
      %p62 = pneg %p61
      // Predicated region
      $region9: #{tpu_custom_call.1} parent=5 // pred_check
        _
      $region10: #{tpu_custom_call.1} parent=5 // pred_check_branch
        %64 = sbr.rel (%p61) target = $region12
      $region11: #{tpu_custom_call.1} parent=5 // pred_region
        %s65 = ssub.s32 %s9, 1
        // Predicated region
        $region13: #{tpu_custom_call.1} parent=11 // pred_check
          %p66 = pneg %p30
        $region14: #{tpu_custom_call.1} parent=11 // pred_check_branch
          %68 = sbr.rel (%p66) target = $region16
        $region15: #{tpu_custom_call.1} parent=11 // pred_region
          %s70 = ssub.s32 128, 128
          %71 = vsyncadd [#allocation3], %s70
          %s73 = sshll.u32 [#allocation2], 4
          %s74 = int_to_ptr.vmem [resolvable:$true] %s73
          %76 = dma.hbm_to_vmem [thread:$0]  %s0, 128, %s74, [#allocation3]
        $region16: #{tpu_custom_call.1} parent=11 // pred_fallthru
          _
      $region12: #{tpu_custom_call.1} parent=5 // pred_fallthru
        _
      %p77 = scmp.lt.s32.totalorder %s9, 2
      // Predicated region
      $region17: #{tpu_custom_call.1} parent=5 // pred_check
        %p78 = pneg %p77
      $region18: #{tpu_custom_call.1} parent=5 // pred_check_branch
        %80 = sbr.rel (%p78) target = $region20
      $region19: #{tpu_custom_call.1} parent=5 // pred_region
        _
      $region20: #{tpu_custom_call.1} parent=5 // pred_fallthru
        _
      %p81 = scmp.le.s32.totalorder 1, %s9
      %p82 = scmp.lt.s32.totalorder %s9, 3
      %p83 = pnand %p81, %p82
      %p84 = pneg %p83
      // Predicated region
      $region21: #{tpu_custom_call.1} parent=5 // pred_check
        _
      $region22: #{tpu_custom_call.1} parent=5 // pred_check_branch
        %86 = sbr.rel (%p83) target = $region24
      $region23: #{tpu_custom_call.1} parent=5 // pred_region
        %s87 = ssub.s32 %s9, 1
        // Predicated region
        $region25: #{tpu_custom_call.1} parent=23 // pred_check
          %p88 = pneg %p30
        $region26: #{tpu_custom_call.1} parent=23 // pred_check_branch
          %90 = sbr.rel (%p88) target = $region28
        $region27: #{tpu_custom_call.1} parent=23 // pred_region
          %91 = dma.done [#allocation3], 128
        $region28: #{tpu_custom_call.1} parent=23 // pred_fallthru
          _
        %p92 = pneg %p30
        %p93 = pneg %p27
        %p94 = pneg %p51
        %p95 = pneg %p48
        %v96 = vld [vmem:[#allocation2] sm:$0xff]
        %v97 = vadd.f32 %v96, 1.0
        %98 = vst [vmem:[#allocation5] sm:$0xff] %v97
        // Predicated region
        $region29: #{tpu_custom_call.1} parent=23 // pred_check
          %p99 = pneg %p48
        $region30: #{tpu_custom_call.1} parent=23 // pred_check_branch
          %101 = sbr.rel (%p99) target = $region32
        $region31: #{tpu_custom_call.1} parent=23 // pred_region
          %s103 = ssub.s32 128, 128
          %104 = vsyncadd [#allocation4], %s103
          %s106 = sshll.u32 [#allocation5], 4
          %s107 = int_to_ptr.vmem [resolvable:$true] %s106
          %109 = dma.vmem_to_hbm [thread:$0]  %s107, 128, %s1, [#allocation4]
        $region32: #{tpu_custom_call.1} parent=23 // pred_fallthru
          _
        // Predicated region
        $region33: #{tpu_custom_call.1} parent=23 // pred_check
          %p110 = pneg %p48
        $region34: #{tpu_custom_call.1} parent=23 // pred_check_branch
          %112 = sbr.rel (%p110) target = $region36
        $region35: #{tpu_custom_call.1} parent=23 // pred_region
          %113 = dma.done [#allocation4], 128
        $region36: #{tpu_custom_call.1} parent=23 // pred_fallthru
          _
      $region24: #{tpu_custom_call.1} parent=5 // pred_fallthru
        _
      %p114 = scmp.le.s32.totalorder 2, %s9
      // Predicated region
      $region37: #{tpu_custom_call.1} parent=5 // pred_check
        %p115 = pneg %p114
      $region38: #{tpu_custom_call.1} parent=5 // pred_check_branch
        %117 = sbr.rel (%p115) target = $region40
      $region39: #{tpu_custom_call.1} parent=5 // pred_region
        %s118 = ssub.s32 %s9, 2
      $region40: #{tpu_custom_call.1} parent=5 // pred_fallthru
        _
    $region6: #{tpu_custom_call.1} parent=1 // loop_footer
      %s13 = sadd.s32 1, %s9
    $region7: #{tpu_custom_call.1} parent=1 // loop_footer_branch
      %8 = sbr.rel target = $region3
    $region8: #{tpu_custom_call.1} parent=1 // loop_exit
      _
    %119 = vsyncpa [#allocation3], 1
    %s120 = scalar_lea.sflag [#allocation3], 1
    %121 = vsyncpa %s120, 1
    %122 = vsyncpa [#allocation4], 1
    %s123 = scalar_lea.sflag [#allocation4], 1
    %124 = vsyncpa %s123, 1

// kernel: tpu_custom_call.1
$region0: #{tpu_custom_call.1}
  #allocation0 [shape = 'u32[]', space=smem, size = 0x4, offset = 0x4, fixed_abs, tag = 'smem constant byte address 0x4 - core index']
  #allocation1 [shape = 'u32[144,128]{1,0:T(1,128)}', space=vmem, size = 0x12000, scoped, tag = 'internal scratch']
  %s0 = inlined_call_operand.hbm [shape: f32[200,300], index: 0, kind: input, shape index: {}]
  %s1 = inlined_call_operand.vmem [shape: bf16[300,128], index: 1, kind: input, shape index: {}]
  %s2 = inlined_call_operand.vmem [shape: f32[1,128], index: 2, kind: input, shape index: {}]
  %s3 = inlined_call_operand.vmem [shape: bf16[128,300], index: 3, kind: input, shape index: {}]
  %s4 = inlined_call_operand.vmem [shape: f32[1,300], index: 4, kind: input, shape index: {}]
  %s5 = inlined_call_operand.hbm [shape: f32[200,300], index: 5, kind: output, shape index: {}]
  %s6 = sld [smem:[#allocation0]]
  $region57: #{tpu_custom_call.1} parent=0
    _
  %s8 = ssub.s32 1, %s6
  %s9 = scalar_select 0, %s8, %s6
  $region1: #{tpu_custom_call.1} parent=0
    #allocation2 [shape = 'u8[344064]{0}', space=vmem, size = 0x54000, scoped, tag = 'input window, operand 0']
    #allocation3 [shape = 's32[2]{0}', space=sflag, size = 0x8, scoped, tag = 'scoped memory for tpu_custom_call.1']
    #allocation4 [shape = 's32[2]{0}', space=sflag, size = 0x8, scoped, tag = 'scoped memory for tpu_custom_call.1']
    #allocation5 [shape = 'u8[344064]{0}', space=vmem, size = 0x54000, scoped, tag = 'output window, operand 0']
    %10 = vsyncpa [#allocation3], 0
    %s11 = scalar_lea.sflag [#allocation3], 1
    %12 = vsyncpa %s11, 0
    %13 = vsyncpa [#allocation4], 0
    %s14 = scalar_lea.sflag [#allocation4], 1
    %15 = vsyncpa %s14, 0
    loop: start=0, step=1, limit=4
    $region2: #{tpu_custom_call.1} parent=1 // loop_pre_header
      _
    $region3: #{tpu_custom_call.1} parent=1 // loop_header
      %s17 = sphi 0, %s21
      %p18 = scmp.ge.s32.totalorder %s17, 4
      %s27 = sphi 0, %s29
      %s30 = sphi 0, %s27
      %s31 = sphi 0, %s30
      %s47 = sphi 0, %s31
      %s51 = sphi 0, %s51
      %s53 = sphi 0, %s51
      %s54 = sphi 0, %s53
      %s68 = sphi 0, %s54
      %s72 = sphi 0, %s72
      %s74 = sphi 0, %s72
      %s75 = sphi 0, %s74
      %s89 = sphi 0, %s75
      %s93 = sphi 0, %s93
      %s95 = sphi 0, %s93
      %s96 = sphi 0, %s95
      %s110 = sphi 0, %s96
      %s114 = sphi 0, %s114
      %s116 = sphi 0, %s114
      %s117 = sphi 0, %s116
      %s131 = sphi 0, %s117
      %s137 = sphi 0, %s139
      %s140 = sphi 0, %s137
      %s141 = sphi 0, %s140
      %s157 = sphi 0, %s141
    $region4: #{tpu_custom_call.1} parent=1 // loop_header_branch
      %20 = sbr.rel (%p18) target = $region8
    $region5: #{tpu_custom_call.1} parent=1 // loop_body
      %s22 = ssub.s32 %s17, 1
      %s23 = ssub.s32 %s17, 2
      %s24 = sadd.s32 %s17, 1
      %s25 = ssub.s32 %s17, %s24
      %p26 = scmp.eq.s32.totalorder %s25, 0
      %s28 = sadd.s32 %s27, 1
      %s29 = scalar_select %p26, %s27, %s28
      %p32 = pneg %p26
      %p33 = scmp.eq.s32.totalorder %s17, 1
      %p34 = por %p32, %p33
      %p35 = scmp.ne.s32.totalorder %s27, %s30
      %p36 = scmp.eq.s32.totalorder %s17, 0
      %p37 = por %p35, %p36
      %p38 = scmp.ne.s32.totalorder %s27, %s30
      %p39 = scmp.eq.s32.totalorder %s22, 1
      %p40 = por %p38, %p39
      %p41 = scmp.ne.s32.totalorder %s30, %s31
      %p42 = scmp.eq.s32.totalorder %s22, 0
      %p43 = por %p41, %p42
      %p44 = scmp.ne.s32.totalorder %s30, %s31
      %p45 = scmp.eq.s32.totalorder %s23, 1
      %p46 = por %p44, %p45
      %p48 = scmp.ne.s32.totalorder %s31, %s47
      %p49 = scmp.eq.s32.totalorder %s23, 0
      %p50 = por %p48, %p49
      %s52 = sadd.s32 %s51, 1
      %p55 = scmp.eq.s32.totalorder %s17, 1
      %p56 = scmp.ne.s32.totalorder %s51, %s53
      %p57 = scmp.eq.s32.totalorder %s17, 0
      %p58 = por %p56, %p57
      %p59 = scmp.ne.s32.totalorder %s51, %s53
      %p60 = scmp.eq.s32.totalorder %s22, 1
      %p61 = por %p59, %p60
      %p62 = scmp.ne.s32.totalorder %s53, %s54
      %p63 = scmp.eq.s32.totalorder %s22, 0
      %p64 = por %p62, %p63
      %p65 = scmp.ne.s32.totalorder %s53, %s54
      %p66 = scmp.eq.s32.totalorder %s23, 1
      %p67 = por %p65, %p66
      %p69 = scmp.ne.s32.totalorder %s54, %s68
      %p70 = scmp.eq.s32.totalorder %s23, 0
      %p71 = por %p69, %p70
      %s73 = sadd.s32 %s72, 1
      %p76 = scmp.eq.s32.totalorder %s17, 1
      %p77 = scmp.ne.s32.totalorder %s72, %s74
      %p78 = scmp.eq.s32.totalorder %s17, 0
      %p79 = por %p77, %p78
      %p80 = scmp.ne.s32.totalorder %s72, %s74
      %p81 = scmp.eq.s32.totalorder %s22, 1
      %p82 = por %p80, %p81
      %p83 = scmp.ne.s32.totalorder %s74, %s75
      %p84 = scmp.eq.s32.totalorder %s22, 0
      %p85 = por %p83, %p84
      %p86 = scmp.ne.s32.totalorder %s74, %s75
      %p87 = scmp.eq.s32.totalorder %s23, 1
      %p88 = por %p86, %p87
      %p90 = scmp.ne.s32.totalorder %s75, %s89
      %p91 = scmp.eq.s32.totalorder %s23, 0
      %p92 = por %p90, %p91
      %s94 = sadd.s32 %s93, 1
      %p97 = scmp.eq.s32.totalorder %s17, 1
      %p98 = scmp.ne.s32.totalorder %s93, %s95
      %p99 = scmp.eq.s32.totalorder %s17, 0
      %p100 = por %p98, %p99
      %p101 = scmp.ne.s32.totalorder %s93, %s95
      %p102 = scmp.eq.s32.totalorder %s22, 1
      %p103 = por %p101, %p102
      %p104 = scmp.ne.s32.totalorder %s95, %s96
      %p105 = scmp.eq.s32.totalorder %s22, 0
      %p106 = por %p104, %p105
      %p107 = scmp.ne.s32.totalorder %s95, %s96
      %p108 = scmp.eq.s32.totalorder %s23, 1
      %p109 = por %p107, %p108
      %p111 = scmp.ne.s32.totalorder %s96, %s110
      %p112 = scmp.eq.s32.totalorder %s23, 0
      %p113 = por %p111, %p112
      %s115 = sadd.s32 %s114, 1
      %p118 = scmp.eq.s32.totalorder %s17, 1
      %p119 = scmp.ne.s32.totalorder %s114, %s116
      %p120 = scmp.eq.s32.totalorder %s17, 0
      %p121 = por %p119, %p120
      %p122 = scmp.ne.s32.totalorder %s114, %s116
      %p123 = scmp.eq.s32.totalorder %s22, 1
      %p124 = por %p122, %p123
      %p125 = scmp.ne.s32.totalorder %s116, %s117
      %p126 = scmp.eq.s32.totalorder %s22, 0
      %p127 = por %p125, %p126
      %p128 = scmp.ne.s32.totalorder %s116, %s117
      %p129 = scmp.eq.s32.totalorder %s23, 1
      %p130 = por %p128, %p129
      %p132 = scmp.ne.s32.totalorder %s117, %s131
      %p133 = scmp.eq.s32.totalorder %s23, 0
      %p134 = por %p132, %p133
      %s135 = ssub.s32 %s17, %s24
      %p136 = scmp.eq.s32.totalorder %s135, 0
      %s138 = sadd.s32 %s137, 1
      %s139 = scalar_select %p136, %s137, %s138
      %p142 = pneg %p136
      %p143 = scmp.eq.s32.totalorder %s17, 1
      %p144 = por %p142, %p143
      %p145 = scmp.ne.s32.totalorder %s137, %s140
      %p146 = scmp.eq.s32.totalorder %s17, 0
      %p147 = por %p145, %p146
      %p148 = scmp.ne.s32.totalorder %s137, %s140
      %p149 = scmp.eq.s32.totalorder %s22, 1
      %p150 = por %p148, %p149
      %p151 = scmp.ne.s32.totalorder %s140, %s141
      %p152 = scmp.eq.s32.totalorder %s22, 0
      %p153 = por %p151, %p152
      %p154 = scmp.ne.s32.totalorder %s140, %s141
      %p155 = scmp.eq.s32.totalorder %s23, 1
      %p156 = por %p154, %p155
      %p158 = scmp.ne.s32.totalorder %s141, %s157
      %p159 = scmp.eq.s32.totalorder %s23, 0
      %p160 = por %p158, %p159
      %p161 = scmp.le.s32.totalorder 1, %s17
      %p162 = scmp.lt.s32.totalorder %s17, 3
      %p163 = pnand %p161, %p162
      %p164 = pneg %p163
      // Predicated region
      $region9: #{tpu_custom_call.1} parent=5 // pred_check
        _
      $region10: #{tpu_custom_call.1} parent=5 // pred_check_branch
        %166 = sbr.rel (%p163) target = $region12
      $region11: #{tpu_custom_call.1} parent=5 // pred_region
        %s167 = ssub.s32 %s17, 1
        // Predicated region
        $region13: #{tpu_custom_call.1} parent=11 // pred_check
          %p168 = pneg %p64
        $region14: #{tpu_custom_call.1} parent=11 // pred_check_branch
          %170 = sbr.rel (%p168) target = $region16
        $region15: #{tpu_custom_call.1} parent=11 // pred_region
          _
        $region16: #{tpu_custom_call.1} parent=11 // pred_fallthru
          _
        // Predicated region
        $region17: #{tpu_custom_call.1} parent=11 // pred_check
          %p171 = pneg %p85
        $region18: #{tpu_custom_call.1} parent=11 // pred_check_branch
          %173 = sbr.rel (%p171) target = $region20
        $region19: #{tpu_custom_call.1} parent=11 // pred_region
          _
        $region20: #{tpu_custom_call.1} parent=11 // pred_fallthru
          _
        // Predicated region
        $region21: #{tpu_custom_call.1} parent=11 // pred_check
          %p174 = pneg %p106
        $region22: #{tpu_custom_call.1} parent=11 // pred_check_branch
          %176 = sbr.rel (%p174) target = $region24
        $region23: #{tpu_custom_call.1} parent=11 // pred_region
          _
        $region24: #{tpu_custom_call.1} parent=11 // pred_fallthru
          _
        // Predicated region
        $region25: #{tpu_custom_call.1} parent=11 // pred_check
          %p177 = pneg %p127
        $region26: #{tpu_custom_call.1} parent=11 // pred_check_branch
          %179 = sbr.rel (%p177) target = $region28
        $region27: #{tpu_custom_call.1} parent=11 // pred_region
          _
        $region28: #{tpu_custom_call.1} parent=11 // pred_fallthru
          _
      $region12: #{tpu_custom_call.1} parent=5 // pred_fallthru
        _
      %p180 = scmp.lt.s32.totalorder %s17, 2
      // Predicated region
      $region29: #{tpu_custom_call.1} parent=5 // pred_check
        %p181 = pneg %p180
      $region30: #{tpu_custom_call.1} parent=5 // pred_check_branch
        %183 = sbr.rel (%p181) target = $region32
      $region31: #{tpu_custom_call.1} parent=5 // pred_region
        // Predicated region
        $region33: #{tpu_custom_call.1} parent=31 // pred_check
          %p184 = pneg %p37
        $region34: #{tpu_custom_call.1} parent=31 // pred_check_branch
          %186 = sbr.rel (%p184) target = $region36
        $region35: #{tpu_custom_call.1} parent=31 // pred_region
          %s187 = sand.u32 %s27, 1
          %s188 = scalar_lea.sflag [#allocation3], %s187
          %s189 = sand.u32 %s27, 1
          %s190 = smul.addr %s189, 336
          %s191 = scalar_lea.vmem [#allocation2], %s190
          %s192 = smul.u32 14, %s17
          %s193 = ssub.s32 25, %s192
          %p194 = scmp.lt.s32.totalorder %s193, 14
          %s195 = scalar_select %p194, %s193, 14
          %s196 = smul.u32 128, %s195
          %s197 = smul.u32 %s196, 3
          %s199 = ssub.s32 5376, %s197
          %200 = vsyncadd %s188, %s199
          %p201 = scmp.ne.s32.totalorder 0, %s197
          %s202 = smul.addr %s192, 3
          %s203 = smul.addr %s202, 128
          %s204 = scalar_lea.hbm %s0, %s203
          %s205 = smul.u32 24, %s195
          %s206 = sshll.u32 %s191, 4
          %s207 = int_to_ptr.vmem [resolvable:$true] %s206
          %s208 = sshll.u32 %s205, 4
          %212 = dma.hbm_to_vmem [thread:$0]  (%p201), %s204, %s208, %s207, %s188, 384, 384, 24
        $region36: #{tpu_custom_call.1} parent=31 // pred_fallthru
          _
      $region32: #{tpu_custom_call.1} parent=5 // pred_fallthru
        _
      %p213 = scmp.le.s32.totalorder 1, %s17
      %p214 = scmp.lt.s32.totalorder %s17, 3
      %p215 = pnand %p213, %p214
      %p216 = pneg %p215
      // Predicated region
      $region37: #{tpu_custom_call.1} parent=5 // pred_check
        _
      $region38: #{tpu_custom_call.1} parent=5 // pred_check_branch
        %218 = sbr.rel (%p215) target = $region40
      $region39: #{tpu_custom_call.1} parent=5 // pred_region
        %s219 = ssub.s32 %s17, 1
        %s220 = sand.u32 %s30, 1
        %s221 = scalar_lea.sflag [#allocation3], %s220
        %s222 = sand.u32 %s30, 1
        %s223 = smul.addr %s222, 336
        %s224 = scalar_lea.vmem [#allocation2], %s223
        // Predicated region
        $region41: #{tpu_custom_call.1} parent=39 // pred_check
          %p225 = pneg %p43
        $region42: #{tpu_custom_call.1} parent=39 // pred_check_branch
          %227 = sbr.rel (%p225) target = $region44
        $region43: #{tpu_custom_call.1} parent=39 // pred_region
          %228 = dma.done %s221, 5376
        $region44: #{tpu_custom_call.1} parent=39 // pred_fallthru
          _
        %s229 = sand.u32 %s30, 1
        %s230 = scalar_lea.sflag [#allocation3], %s229
        %s231 = sand.u32 %s30, 1
        %s232 = smul.addr %s231, 336
        %s233 = scalar_lea.vmem [#allocation2], %s232
        %p234 = pneg %p43
        %p235 = pneg %p40
        %p236 = pneg %p64
        %p237 = pneg %p61
        %p238 = pneg %p85
        %p239 = pneg %p82
        %p240 = pneg %p106
        %p241 = pneg %p103
        %p242 = pneg %p127
        %p243 = pneg %p124
        %p244 = pneg %p153
        %p245 = pneg %p150
        %s246 = sand.u32 %s140, 1
        %s247 = scalar_lea.sflag [#allocation4], %s246
        %s248 = sand.u32 %s140, 1
        %s249 = smul.addr %s248, 336
        %s250 = scalar_lea.vmem [#allocation5], %s249
        %s251 = smul.u32 14, %s22
        %s252 = ssub.s32 25, %s251
        %p253 = scmp.lt.s32.totalorder %s252, 14
        %s254 = scalar_select %p253, %s252, 14
        %s255 = smul.u32 128, %s254
        %s256 = smul.u32 %s255, 3
        %s257 = smul.u32 14, %s22
        %s258 = ssub.s32 25, %s257
        %p259 = scmp.lt.s32.totalorder %s258, 14
        %s260 = scalar_select %p259, %s258, 14
        %s261 = smul.u32 128, %s260
        %s262 = smul.u32 %s261, 3
        %v264 = vld [vmem:[%s224] sm:$0xff]
        %v265 = vld [vmem:[%s224 + $0x8] sm:$0xff]
        %v266 = vld [vmem:[%s224 + $0x10] sm:$0xff]
        %v267 = vld [vmem:[%s224 + $0x18] sm:$0xff]
        %v268 = vld [vmem:[%s224 + $0x20] sm:$0xff]
        %v269 = vld [vmem:[%s224 + $0x28] sm:$0xff]
        %v270 = vld [vmem:[%s224 + $0x30] sm:$0xff]
        %v271 = vld [vmem:[%s224 + $0x38] sm:$0xff]
        %v272 = vld [vmem:[%s224 + $0x40] sm:$0xff]
        %v273 = vld [vmem:[%s224 + $0x48] sm:$0xff]
        %v274 = vld [vmem:[%s224 + $0x50] sm:$0xff]
        %v275 = vld [vmem:[%s224 + $0x58] sm:$0xff]
        %v276 = vld [vmem:[%s224 + $0x60] sm:$0xff]
        %v277 = vld [vmem:[%s224 + $0x68] sm:$0xff]
        %v278 = vld [vmem:[%s224 + $0x70] sm:$0xff]
        %v279 = vld [vmem:[%s224 + $0x78] sm:$0xff]
        %v280 = vld [vmem:[%s224 + $0x80] sm:$0xff]
        %v281 = vld [vmem:[%s224 + $0x88] sm:$0xff]
        %v282 = vld [vmem:[%s224 + $0x90] sm:$0xff]
        %v283 = vld [vmem:[%s224 + $0x98] sm:$0xff]
        %v284 = vld [vmem:[%s224 + $0xa0] sm:$0xff]
        %v285 = vld [vmem:[%s224 + $0xa8] sm:$0xff]
        %v286 = vld [vmem:[%s224 + $0xb0] sm:$0xff]
        %v287 = vld [vmem:[%s224 + $0xb8] sm:$0xff]
        %v288 = vld [vmem:[%s224 + $0xc0] sm:$0xff]
        %v289 = vld [vmem:[%s224 + $0xc8] sm:$0xff]
        %v290 = vld [vmem:[%s224 + $0xd0] sm:$0xff]
        %v291 = vld [vmem:[%s224 + $0xd8] sm:$0xff]
        %v292 = vld [vmem:[%s224 + $0xe0] sm:$0xff]
        %v293 = vld [vmem:[%s224 + $0xe8] sm:$0xff]
        %v294 = vld [vmem:[%s224 + $0xf0] sm:$0xff]
        %v295 = vld [vmem:[%s224 + $0xf8] sm:$0xff]
        %v296 = vld [vmem:[%s224 + $0x100] sm:$0xff]
        %v297 = vld [vmem:[%s224 + $0x108] sm:$0xff]
        %v298 = vld [vmem:[%s224 + $0x110] sm:$0xff]
        %v299 = vld [vmem:[%s224 + $0x118] sm:$0xff]
        %v300 = vld [vmem:[%s224 + $0x120] sm:$0xff]
        %v301 = vld [vmem:[%s224 + $0x128] sm:$0xff]
        %v302 = vld [vmem:[%s224 + $0x130] sm:$0xff]
        %v303 = vld [vmem:[%s224 + $0x138] sm:$0xff]
        %v304 = vld [vmem:[%s224 + $0x140] sm:$0xff]
        %v305 = vld [vmem:[%s224 + $0x148] sm:$0xff]
        %v306 = vpack.c.bf16 %v267, %v264
        %v307 = vpack.c.bf16 %v268, %v265
        %v308 = vpack.c.bf16 %v269, %v266
        %v309 = vpack.c.bf16 %v273, %v270
        %v310 = vpack.c.bf16 %v274, %v271
        %v311 = vpack.c.bf16 %v275, %v272
        %v312 = vpack.c.bf16 %v279, %v276
        %v313 = vpack.c.bf16 %v280, %v277
        %v314 = vpack.c.bf16 %v281, %v278
        %v315 = vpack.c.bf16 %v285, %v282
        %v316 = vpack.c.bf16 %v286, %v283
        %v317 = vpack.c.bf16 %v287, %v284
        %v318 = vpack.c.bf16 %v291, %v288
        %v319 = vpack.c.bf16 %v292, %v289
        %v320 = vpack.c.bf16 %v293, %v290
        %v321 = vpack.c.bf16 %v297, %v294
        %v322 = vpack.c.bf16 %v298, %v295
        %v323 = vpack.c.bf16 %v299, %v296
        %v324 = vpack.c.bf16 %v303, %v300
        %v325 = vpack.c.bf16 %v304, %v301
        %v326 = vpack.c.bf16 %v305, %v302
        %v327 = vld [vmem:[%s1] sm:$0xf]
        %v328 = vld [vmem:[%s1 + $0x4] sm:$0xf]
        %v329 = vld [vmem:[%s1 + $0x8] sm:$0xf]
        %v330 = vld [vmem:[%s1 + $0xc] sm:$0xf]
        %v331 = vld [vmem:[%s1 + $0x10] sm:$0xf]
        %v332 = vld [vmem:[%s1 + $0x14] sm:$0xf]
        %v333 = vld [vmem:[%s1 + $0x18] sm:$0xf]
        %v334 = vld [vmem:[%s1 + $0x1c] sm:$0xf]
        %v335 = vld [vmem:[%s1 + $0x20] sm:$0xf]
        %v336 = vld [vmem:[%s1 + $0x24] sm:$0xf]
        %v337 = vld [vmem:[%s1 + $0x28] sm:$0xf]
        %v338 = vld [vmem:[%s1 + $0x2c] sm:$0xf]
        %v339 = vld [vmem:[%s1 + $0x30] sm:$0xf]
        %v340 = vld [vmem:[%s1 + $0x34] sm:$0xf]
        %v341 = vld [vmem:[%s1 + $0x38] sm:$0xf]
        %v342 = vld [vmem:[%s1 + $0x3c] sm:$0xf]
        %v343 = vld [vmem:[%s1 + $0x40] sm:$0xf]
        %v344 = vld [vmem:[%s1 + $0x44] sm:$0xf]
        %v345 = vld [vmem:[%s1 + $0x48] sm:$0xf]
        %v346 = vld [vmem:[%s1 + $0x4c] sm:$0xf]
        %v347 = vld [vmem:[%s1 + $0x50] sm:$0xf]
        %v348 = vld [vmem:[%s1 + $0x54] sm:$0xf]
        %v349 = vld [vmem:[%s1 + $0x58] sm:$0xf]
        %v350 = vld [vmem:[%s1 + $0x5c] sm:$0xf]
        %v351 = vld [vmem:[%s1 + $0x60] sm:$0xf]
        %v352 = vld [vmem:[%s1 + $0x64] sm:$0xf]
        %v353 = vld [vmem:[%s1 + $0x68] sm:$0xf]
        %v354 = vld [vmem:[%s1 + $0x6c] sm:$0xf]
        %v355 = vld [vmem:[%s1 + $0x70] sm:$0xf]
        %v356 = vld [vmem:[%s1 + $0x74] sm:$0xf]
        %v357 = vld [vmem:[%s1 + $0x78] sm:$0xf]
        %v358 = vld [vmem:[%s1 + $0x7c] sm:$0xf]
        %v359 = vld [vmem:[%s1 + $0x80] sm:$0xf]
        %v360 = vld [vmem:[%s1 + $0x84] sm:$0xf]
        %v361 = vld [vmem:[%s1 + $0x88] sm:$0xf]
        %v362 = vld [vmem:[%s1 + $0x8c] sm:$0xf]
        %v363 = vld [vmem:[%s1 + $0x90] sm:$0xf]
        %v364 = vld [vmem:[%s1 + $0x94] sm:$0x3]
        %v365 = vld [vmem:[%s2] sm:$0x1]
        %v367 = vlaneseq
        %v368 = vshrl.u32 %v367, 7
        %v369 = vsub.s32 0, %v368
        %v370 = vrot.slane %v365, %v369
        %v410 = vunpack.c.l.b16 %v327
        %v411 = vunpack.c.l.b16 %v328
        %v412 = vunpack.c.l.b16 %v329
        %v413 = vunpack.c.l.b16 %v330
        %v414 = vunpack.c.l.b16 %v331
        %v415 = vunpack.c.l.b16 %v332
        %v416 = vunpack.c.l.b16 %v333
        %v417 = vunpack.c.l.b16 %v334
        %v418 = vunpack.c.l.b16 %v335
        %v419 = vunpack.c.l.b16 %v336
        %v420 = vunpack.c.l.b16 %v337
        %v421 = vunpack.c.l.b16 %v338
        %v422 = vunpack.c.l.b16 %v339
        %v423 = vunpack.c.l.b16 %v340
        %v424 = vunpack.c.l.b16 %v341
        %v425 = vunpack.c.l.b16 %v342
        %v426 = vunpack.c.l.b16 %v343
        %v427 = vunpack.c.l.b16 %v344
        %v428 = vunpack.c.l.b16 %v345
        %v429 = vunpack.c.l.b16 %v346
        %v430 = vunpack.c.l.b16 %v347
        %v431 = vunpack.c.l.b16 %v348
        %v432 = vunpack.c.l.b16 %v349
        %v433 = vunpack.c.l.b16 %v350
        %v434 = vunpack.c.l.b16 %v351
        %v435 = vunpack.c.l.b16 %v352
        %v436 = vunpack.c.l.b16 %v353
        %v437 = vunpack.c.l.b16 %v354
        %v438 = vunpack.c.l.b16 %v355
        %v439 = vunpack.c.l.b16 %v356
        %v440 = vunpack.c.l.b16 %v357
        %v441 = vunpack.c.l.b16 %v358
        %v442 = vunpack.c.l.b16 %v359
        %v443 = vunpack.c.l.b16 %v360
        %v444 = vunpack.c.l.b16 %v361
        %v445 = vunpack.c.l.b16 %v362
        %v446 = vunpack.c.l.b16 %v363
        %v447 = vunpack.c.l.b16 %v364
        %v448 = vpack.c.b16 %v411, %v410
        %v449 = vpack.c.b16 %v413, %v412
        %v450 = vpack.c.b16 %v415, %v414
        %v451 = vpack.c.b16 %v417, %v416
        %v452 = vpack.c.b16 %v419, %v418
        %v453 = vpack.c.b16 %v421, %v420
        %v454 = vpack.c.b16 %v423, %v422
        %v455 = vpack.c.b16 %v425, %v424
        %v456 = vpack.c.b16 %v427, %v426
        %v457 = vpack.c.b16 %v429, %v428
        %v458 = vpack.c.b16 %v431, %v430
        %v459 = vpack.c.b16 %v433, %v432
        %v460 = vpack.c.b16 %v435, %v434
        %v461 = vpack.c.b16 %v437, %v436
        %v462 = vpack.c.b16 %v439, %v438
        %v463 = vpack.c.b16 %v441, %v440
        %v464 = vpack.c.b16 %v443, %v442
        %v465 = vpack.c.b16 %v445, %v444
        %v466 = vpack.c.b16 %v447, %v446
        %vm485 = vcmask 359424
        %v487 = vsel %vm485, %v308, 0
        %v490 = vsel %vm485, %v311, 0
        %v493 = vsel %vm485, %v314, 0
        %v496 = vsel %vm485, %v317, 0
        %v499 = vsel %vm485, %v320, 0
        %v502 = vsel %vm485, %v323, 0
        %v505 = vsel %vm485, %v326, 0
        %vm507 = vcmask 1045504
        %v509 = vsel %vm507, %v466, 0
        %511 = vmatprep.subr.bf16.mxu0 0
        %512 = vmatpush1.bf16.msra.mxu0 %v448
        %513 = vmatprep.subr.bf16.mxu0 0
        %514 = vmatpush1.bf16.msra.mxu0 %v449
        %515 = vmatprep.subr.bf16.mxu0 0
        %516 = vmatpush1.bf16.msra.mxu0 %v450
        %517 = vmatprep.subr.bf16.mxu0 0
        %518 = vmatpush1.bf16.msra.mxu0 %v451
        %519 = vmatprep.subr.bf16.mxu0 0
        %520 = vmatpush1.bf16.msra.mxu0 %v452
        %521 = vmatprep.subr.bf16.mxu0 0
        %522 = vmatpush1.bf16.msra.mxu0 %v453
        %523 = vmatprep.subr.bf16.mxu0 0
        %524 = vmatpush1.bf16.msra.mxu0 %v454
        %525 = vmatprep.subr.bf16.mxu0 0
        %526 = vmatpush1.bf16.msra.mxu0 %v455
        %527 = vmatprep.subr.bf16.mxu0 0
        %528 = vmatpush1.bf16.msra.mxu0 %v456
        %529 = vmatprep.subr.bf16.mxu0 0
        %530 = vmatpush1.bf16.msra.mxu0 %v457
        %531 = vmatprep.subr.bf16.mxu0 0
        %532 = vmatpush1.bf16.msra.mxu0 %v458
        %533 = vmatprep.subr.bf16.mxu0 0
        %534 = vmatpush1.bf16.msra.mxu0 %v459
        %535 = vmatprep.subr.bf16.mxu0 0
        %536 = vmatpush1.bf16.msra.mxu0 %v460
        %537 = vmatprep.subr.bf16.mxu0 0
        %538 = vmatpush1.bf16.msra.mxu0 %v461
        %539 = vmatprep.subr.bf16.mxu0 0
        %540 = vmatpush1.bf16.msra.mxu0 %v462
        %541 = vmatprep.subr.bf16.mxu0 0
        %542 = vmatpush1.bf16.msra.mxu0 %v463
        %543 = vmatprep.mubr.bf16.mxu0 %v307
        %544 = vmatmul.mubr.bf16.gmra.mrb[0].mxu0 %v306
        %v545 = vpop.f32.mrb[0].mxu0
        %v546 = vadd.f32 %v370, %v545
        %v547 = vpop.f32.mrb[0].mxu0
        %v548 = vpop.f32.mrb[0].mxu0
        %v549 = vadd.f32 %v370, %v548
        %v550 = vpop.f32.mrb[0].mxu0
        %551 = vmatprep.mubr.bf16.mxu0 %v310
        %552 = vmatmul.mubr.bf16.gmra.mrb[0].mxu0 %v309
        %v553 = vpop.f32.mrb[0].mxu0
        %v554 = vadd.f32 %v370, %v553
        %v555 = vpop.f32.mrb[0].mxu0
        %v556 = vpop.f32.mrb[0].mxu0
        %v557 = vadd.f32 %v370, %v556
        %v558 = vpop.f32.mrb[0].mxu0
        %559 = vmatprep.mubr.bf16.mxu0 %v313
        %560 = vmatmul.mubr.bf16.gmra.mrb[0].mxu0 %v312
        %v561 = vpop.f32.mrb[0].mxu0
        %v562 = vadd.f32 %v370, %v561
        %v563 = vpop.f32.mrb[0].mxu0
        %v564 = vpop.f32.mrb[0].mxu0
        %v565 = vadd.f32 %v370, %v564
        %v566 = vpop.f32.mrb[0].mxu0
        %567 = vmatprep.mubr.bf16.mxu0 %v316
        %568 = vmatmul.mubr.bf16.gmra.mrb[0].mxu0 %v315
        %v569 = vpop.f32.mrb[0].mxu0
        %v570 = vadd.f32 %v370, %v569
        %v571 = vpop.f32.mrb[0].mxu0
        %v572 = vpop.f32.mrb[0].mxu0
        %v573 = vadd.f32 %v370, %v572
        %v574 = vpop.f32.mrb[0].mxu0
        %575 = vmatprep.mubr.bf16.mxu0 %v319
        %576 = vmatmul.mubr.bf16.gmra.mrb[0].mxu0 %v318
        %v577 = vpop.f32.mrb[0].mxu0
        %v578 = vadd.f32 %v370, %v577
        %v579 = vpop.f32.mrb[0].mxu0
        %v580 = vpop.f32.mrb[0].mxu0
        %v581 = vadd.f32 %v370, %v580
        %v582 = vpop.f32.mrb[0].mxu0
        %583 = vmatprep.mubr.bf16.mxu0 %v322
        %584 = vmatmul.mubr.bf16.gmra.mrb[0].mxu0 %v321
        %v585 = vpop.f32.mrb[0].mxu0
        %v586 = vadd.f32 %v370, %v585
        %v587 = vpop.f32.mrb[0].mxu0
        %v588 = vpop.f32.mrb[0].mxu0
        %v589 = vadd.f32 %v370, %v588
        %v590 = vpop.f32.mrb[0].mxu0
        %591 = vmatprep.mubr.bf16.mxu0 %v325
        %592 = vmatmul.mubr.bf16.gmra.mrb[0].mxu0 %v324
        %v593 = vpop.f32.mrb[0].mxu0
        %v594 = vadd.f32 %v370, %v593
        %v595 = vpop.f32.mrb[0].mxu0
        %v596 = vpop.f32.mrb[0].mxu0
        %v597 = vadd.f32 %v370, %v596
        %v598 = vpop.f32.mrb[0].mxu0
        %599 = vdwg.mxu0
        %600 = vmatprep.subr.bf16.mxu0 0
        %601 = vmatpush1.bf16.msra.mxu0 %v464
        %602 = vmatprep.subr.bf16.mxu0 0
        %603 = vmatpush1.bf16.msra.mxu0 %v465
        %604 = vmatprep.subr.bf16.mxu0 0
        %605 = vmatpush1.bf16.msra.mxu0 %v509
        %606 = vmatprep.subr.bf16.mxu0 0
        %607 = vmatpush1.bf16.msra.mxu0 0
        %608 = vmatprep.subr.bf16.mxu0 0
        %609 = vmatpush1.bf16.msra.mxu0 0
        %610 = vmatprep.subr.bf16.mxu0 0
        %611 = vmatpush1.bf16.msra.mxu0 0
        %612 = vmatprep.subr.bf16.mxu0 0
        %613 = vmatpush1.bf16.msra.mxu0 0
        %614 = vmatprep.subr.bf16.mxu0 0
        %615 = vmatpush1.bf16.msra.mxu0 0
        %616 = vmatprep.subr.bf16.mxu0 0
        %617 = vmatpush1.bf16.msra.mxu0 0
        %618 = vmatprep.subr.bf16.mxu0 0
        %619 = vmatpush1.bf16.msra.mxu0 0
        %620 = vmatprep.subr.bf16.mxu0 0
        %621 = vmatpush1.bf16.msra.mxu0 0
        %622 = vmatprep.subr.bf16.mxu0 0
        %623 = vmatpush1.bf16.msra.mxu0 0
        %624 = vmatprep.subr.bf16.mxu0 0
        %625 = vmatpush1.bf16.msra.mxu0 0
        %626 = vmatprep.subr.bf16.mxu0 0
        %627 = vmatpush1.bf16.msra.mxu0 0
        %628 = vmatprep.subr.bf16.mxu0 0
        %629 = vmatpush1.bf16.msra.mxu0 0
        %630 = vmatprep.subr.bf16.mxu0 0
        %631 = vmatpush1.bf16.msra.mxu0 0
        %632 = vmatprep.mubr.bf16.mxu0 0
        %633 = vmatmul.mubr.bf16.gmra.mrb[0].mxu0 %v487
        %v634 = vpop.f32.mrb[0].mxu0
        %v635 = vadd.f32 %v546, %v634
        %v636 = vpop.f32.mrb[0].mxu0
        %v637 = vpop.f32.mrb[0].mxu0
        %v638 = vadd.f32 %v549, %v637
        %v639 = vpop.f32.mrb[0].mxu0
        %640 = vmatprep.mubr.bf16.mxu0 0
        %641 = vmatmul.mubr.bf16.gmra.mrb[0].mxu0 %v490
        %v642 = vpop.f32.mrb[0].mxu0
        %v643 = vadd.f32 %v554, %v642
        %v644 = vpop.f32.mrb[0].mxu0
        %v645 = vpop.f32.mrb[0].mxu0
        %v646 = vadd.f32 %v557, %v645
        %v647 = vpop.f32.mrb[0].mxu0
        %648 = vmatprep.mubr.bf16.mxu0 0
        %649 = vmatmul.mubr.bf16.gmra.mrb[0].mxu0 %v493
        %v650 = vpop.f32.mrb[0].mxu0
        %v651 = vadd.f32 %v562, %v650
        %v652 = vpop.f32.mrb[0].mxu0
        %v653 = vpop.f32.mrb[0].mxu0
        %v654 = vadd.f32 %v565, %v653
        %v655 = vpop.f32.mrb[0].mxu0
        %656 = vmatprep.mubr.bf16.mxu0 0
        %657 = vmatmul.mubr.bf16.gmra.mrb[0].mxu0 %v496
        %v658 = vpop.f32.mrb[0].mxu0
        %v659 = vadd.f32 %v570, %v658
        %v660 = vpop.f32.mrb[0].mxu0
        %v661 = vpop.f32.mrb[0].mxu0
        %v662 = vadd.f32 %v573, %v661
        %v663 = vpop.f32.mrb[0].mxu0
        %664 = vmatprep.mubr.bf16.mxu0 0
        %665 = vmatmul.mubr.bf16.gmra.mrb[0].mxu0 %v499
        %v666 = vpop.f32.mrb[0].mxu0
        %v667 = vadd.f32 %v578, %v666
        %v668 = vpop.f32.mrb[0].mxu0
        %v669 = vpop.f32.mrb[0].mxu0
        %v670 = vadd.f32 %v581, %v669
        %v671 = vpop.f32.mrb[0].mxu0
        %672 = vmatprep.mubr.bf16.mxu0 0
        %673 = vmatmul.mubr.bf16.gmra.mrb[0].mxu0 %v502
        %v674 = vpop.f32.mrb[0].mxu0
        %v675 = vadd.f32 %v586, %v674
        %v676 = vpop.f32.mrb[0].mxu0
        %v677 = vpop.f32.mrb[0].mxu0
        %v678 = vadd.f32 %v589, %v677
        %v679 = vpop.f32.mrb[0].mxu0
        %680 = vmatprep.mubr.bf16.mxu0 0
        %681 = vmatmul.mubr.bf16.gmra.mrb[0].mxu0 %v505
        %v682 = vpop.f32.mrb[0].mxu0
        %v683 = vadd.f32 %v594, %v682
        %v684 = vpop.f32.mrb[0].mxu0
        %v685 = vpop.f32.mrb[0].mxu0
        %v686 = vadd.f32 %v597, %v685
        %v687 = vpop.f32.mrb[0].mxu0
        %688 = vdwg.mxu0
        %v689 = vxor.u32 %v635, 2147483648
        %v690 = vxor.u32 %v638, 2147483648
        %v691 = vxor.u32 %v643, 2147483648
        %v692 = vxor.u32 %v646, 2147483648
        %v693 = vxor.u32 %v651, 2147483648
        %v694 = vxor.u32 %v654, 2147483648
        %v695 = vxor.u32 %v659, 2147483648
        %v696 = vxor.u32 %v662, 2147483648
        %v697 = vxor.u32 %v667, 2147483648
        %v698 = vxor.u32 %v670, 2147483648
        %v699 = vxor.u32 %v675, 2147483648
        %v700 = vxor.u32 %v678, 2147483648
        %v701 = vxor.u32 %v683, 2147483648
        %v702 = vxor.u32 %v686, 2147483648
        %v703 = vmul.f32 %v689, 1.442695
        %v704 = vpow.pop %v703
        %v705 = vmul.f32 %v690, 1.442695
        %v706 = vpow.pop %v705
        %v707 = vmul.f32 %v691, 1.442695
        %v708 = vpow.pop %v707
        %v709 = vmul.f32 %v692, 1.442695
        %v710 = vpow.pop %v709
        %v711 = vmul.f32 %v693, 1.442695
        %v712 = vpow.pop %v711
        %v713 = vmul.f32 %v694, 1.442695
        %v714 = vpow.pop %v713
        %v715 = vmul.f32 %v695, 1.442695
        %v716 = vpow.pop %v715
        %v717 = vmul.f32 %v696, 1.442695
        %v718 = vpow.pop %v717
        %v719 = vmul.f32 %v697, 1.442695
        %v720 = vpow.pop %v719
        %v721 = vmul.f32 %v698, 1.442695
        %v722 = vpow.pop %v721
        %v723 = vmul.f32 %v699, 1.442695
        %v724 = vpow.pop %v723
        %v725 = vmul.f32 %v700, 1.442695
        %v726 = vpow.pop %v725
        %v727 = vmul.f32 %v701, 1.442695
        %v728 = vpow.pop %v727
        %v729 = vmul.f32 %v702, 1.442695
        %v730 = vpow.pop %v729
        %v731 = vadd.f32 %v704, 1.0
        %v732 = vadd.f32 %v706, 1.0
        %v733 = vadd.f32 %v708, 1.0
        %v734 = vadd.f32 %v710, 1.0
        %v735 = vadd.f32 %v712, 1.0
        %v736 = vadd.f32 %v714, 1.0
        %v737 = vadd.f32 %v716, 1.0
        %v738 = vadd.f32 %v718, 1.0
        %v739 = vadd.f32 %v720, 1.0
        %v740 = vadd.f32 %v722, 1.0
        %v741 = vadd.f32 %v724, 1.0
        %v742 = vadd.f32 %v726, 1.0
        %v743 = vadd.f32 %v728, 1.0
        %v744 = vadd.f32 %v730, 1.0
        %v745 = vrcp.pop %v731
        %v746 = vmul.f32 1.0, %v745
        %v747 = vrcp.pop %v732
        %v748 = vmul.f32 1.0, %v747
        %v749 = vrcp.pop %v733
        %v750 = vmul.f32 1.0, %v749
        %v751 = vrcp.pop %v734
        %v752 = vmul.f32 1.0, %v751
        %v753 = vrcp.pop %v735
        %v754 = vmul.f32 1.0, %v753
        %v755 = vrcp.pop %v736
        %v756 = vmul.f32 1.0, %v755
        %v757 = vrcp.pop %v737
        %v758 = vmul.f32 1.0, %v757
        %v759 = vrcp.pop %v738
        %v760 = vmul.f32 1.0, %v759
        %v761 = vrcp.pop %v739
        %v762 = vmul.f32 1.0, %v761
        %v763 = vrcp.pop %v740
        %v764 = vmul.f32 1.0, %v763
        %v765 = vrcp.pop %v741
        %v766 = vmul.f32 1.0, %v765
        %v767 = vrcp.pop %v742
        %v768 = vmul.f32 1.0, %v767
        %v769 = vrcp.pop %v743
        %v770 = vmul.f32 1.0, %v769
        %v771 = vrcp.pop %v744
        %v772 = vmul.f32 1.0, %v771
        %v773 = vpack.c.bf16 %v748, %v746
        %v774 = vpack.c.bf16 %v752, %v750
        %v775 = vpack.c.bf16 %v756, %v754
        %v776 = vpack.c.bf16 %v760, %v758
        %v777 = vpack.c.bf16 %v764, %v762
        %v778 = vpack.c.bf16 %v768, %v766
        %v779 = vpack.c.bf16 %v772, %v770
        %v780 = vld [vmem:[%s3] sm:$0xff]
        %v781 = vld [vmem:[%s3 + $0x8] sm:$0xf]
        %v782 = vld [vmem:[%s3 + $0xc] sm:$0xff]
        %v783 = vld [vmem:[%s3 + $0x14] sm:$0xf]
        %v784 = vld [vmem:[%s3 + $0x18] sm:$0xff]
        %v785 = vld [vmem:[%s3 + $0x20] sm:$0xf]
        %v786 = vld [vmem:[%s3 + $0x24] sm:$0xff]
        %v787 = vld [vmem:[%s3 + $0x2c] sm:$0xf]
        %v788 = vld [vmem:[%s3 + $0x30] sm:$0xff]
        %v789 = vld [vmem:[%s3 + $0x38] sm:$0xf]
        %v790 = vld [vmem:[%s3 + $0x3c] sm:$0xff]
        %v791 = vld [vmem:[%s3 + $0x44] sm:$0xf]
        %v792 = vld [vmem:[%s3 + $0x48] sm:$0xff]
        %v793 = vld [vmem:[%s3 + $0x50] sm:$0xf]
        %v794 = vld [vmem:[%s3 + $0x54] sm:$0xff]
        %v795 = vld [vmem:[%s3 + $0x5c] sm:$0xf]
        %v796 = vld [vmem:[%s3 + $0x60] sm:$0xff]
        %v797 = vld [vmem:[%s3 + $0x68] sm:$0xf]
        %v798 = vld [vmem:[%s3 + $0x6c] sm:$0xff]
        %v799 = vld [vmem:[%s3 + $0x74] sm:$0xf]
        %v800 = vld [vmem:[%s3 + $0x78] sm:$0xff]
        %v801 = vld [vmem:[%s3 + $0x80] sm:$0xf]
        %v802 = vld [vmem:[%s3 + $0x84] sm:$0xff]
        %v803 = vld [vmem:[%s3 + $0x8c] sm:$0xf]
        %v804 = vld [vmem:[%s3 + $0x90] sm:$0xff]
        %v805 = vld [vmem:[%s3 + $0x98] sm:$0xf]
        %v806 = vld [vmem:[%s3 + $0x9c] sm:$0xff]
        %v807 = vld [vmem:[%s3 + $0xa4] sm:$0xf]
        %v808 = vld [vmem:[%s3 + $0xa8] sm:$0xff]
        %v809 = vld [vmem:[%s3 + $0xb0] sm:$0xf]
        %v810 = vld [vmem:[%s3 + $0xb4] sm:$0xff]
        %v811 = vld [vmem:[%s3 + $0xbc] sm:$0xf]
        %v812 = vld [vmem:[%s4] sm:$0x7]
        %v814 = vlaneseq
        %v815 = vshrl.u32 %v814, 7
        %v816 = vsub.s32 0, %v815
        %v817 = vrot.slane %v812, %v816
        %v818 = vlaneseq
        %v819 = vshrl.u32 %v818, 7
        %v820 = vsub.s32 1, %v819
        %v821 = vrot.slane %v812, %v820
        %v822 = vlaneseq
        %v823 = vshrl.u32 %v822, 7
        %v824 = vsub.s32 2, %v823
        %v825 = vrot.slane %v812, %v824
        %v861 = vunpack.c.l.b16 %v780
        %v862 = vunpack.c.h.b16 %v780
        %v863 = vunpack.c.l.b16 %v781
        %v864 = vunpack.c.l.b16 %v782
        %v865 = vunpack.c.h.b16 %v782
        %v866 = vunpack.c.l.b16 %v783
        %v867 = vunpack.c.l.b16 %v784
        %v868 = vunpack.c.h.b16 %v784
        %v869 = vunpack.c.l.b16 %v785
        %v870 = vunpack.c.l.b16 %v786
        %v871 = vunpack.c.h.b16 %v786
        %v872 = vunpack.c.l.b16 %v787
        %v873 = vunpack.c.l.b16 %v788
        %v874 = vunpack.c.h.b16 %v788
        %v875 = vunpack.c.l.b16 %v789
        %v876 = vunpack.c.l.b16 %v790
        %v877 = vunpack.c.h.b16 %v790
        %v878 = vunpack.c.l.b16 %v791
        %v879 = vunpack.c.l.b16 %v792
        %v880 = vunpack.c.h.b16 %v792
        %v881 = vunpack.c.l.b16 %v793
        %v882 = vunpack.c.l.b16 %v794
        %v883 = vunpack.c.h.b16 %v794
        %v884 = vunpack.c.l.b16 %v795
        %v885 = vunpack.c.l.b16 %v796
        %v886 = vunpack.c.h.b16 %v796
        %v887 = vunpack.c.l.b16 %v797
        %v888 = vunpack.c.l.b16 %v798
        %v889 = vunpack.c.h.b16 %v798
        %v890 = vunpack.c.l.b16 %v799
        %v891 = vunpack.c.l.b16 %v800
        %v892 = vunpack.c.h.b16 %v800
        %v893 = vunpack.c.l.b16 %v801
        %v894 = vunpack.c.l.b16 %v802
        %v895 = vunpack.c.h.b16 %v802
        %v896 = vunpack.c.l.b16 %v803
        %v897 = vunpack.c.l.b16 %v804
        %v898 = vunpack.c.h.b16 %v804
        %v899 = vunpack.c.l.b16 %v805
        %v900 = vunpack.c.l.b16 %v806
        %v901 = vunpack.c.h.b16 %v806
        %v902 = vunpack.c.l.b16 %v807
        %v903 = vunpack.c.l.b16 %v808
        %v904 = vunpack.c.h.b16 %v808
        %v905 = vunpack.c.l.b16 %v809
        %v906 = vunpack.c.l.b16 %v810
        %v907 = vunpack.c.h.b16 %v810
        %v908 = vunpack.c.l.b16 %v811
        %v909 = vpack.c.b16 %v864, %v861
        %v910 = vpack.c.b16 %v865, %v862
        %v911 = vpack.c.b16 %v866, %v863
        %v912 = vpack.c.b16 %v870, %v867
        %v913 = vpack.c.b16 %v871, %v868
        %v914 = vpack.c.b16 %v872, %v869
        %v915 = vpack.c.b16 %v876, %v873
        %v916 = vpack.c.b16 %v877, %v874
        %v917 = vpack.c.b16 %v878, %v875
        %v918 = vpack.c.b16 %v882, %v879
        %v919 = vpack.c.b16 %v883, %v880
        %v920 = vpack.c.b16 %v884, %v881
        %v921 = vpack.c.b16 %v888, %v885
        %v922 = vpack.c.b16 %v889, %v886
        %v923 = vpack.c.b16 %v890, %v887
        %v924 = vpack.c.b16 %v894, %v891
        %v925 = vpack.c.b16 %v895, %v892
        %v926 = vpack.c.b16 %v896, %v893
        %v927 = vpack.c.b16 %v900, %v897
        %v928 = vpack.c.b16 %v901, %v898
        %v929 = vpack.c.b16 %v902, %v899
        %v930 = vpack.c.b16 %v906, %v903
        %v931 = vpack.c.b16 %v907, %v904
        %v932 = vpack.c.b16 %v908, %v905
        %957 = vmatprep.subr.bf16.mxu0 %v910
        %958 = vmatpush1.bf16.msra.mxu0 %v909
        %959 = vmatprep.subr.bf16.mxu0 %v913
        %960 = vmatpush1.bf16.msra.mxu0 %v912
        %961 = vmatprep.subr.bf16.mxu0 %v916
        %962 = vmatpush1.bf16.msra.mxu0 %v915
        %963 = vmatprep.subr.bf16.mxu0 %v919
        %964 = vmatpush1.bf16.msra.mxu0 %v918
        %965 = vmatprep.subr.bf16.mxu0 %v922
        %966 = vmatpush1.bf16.msra.mxu0 %v921
        %967 = vmatprep.subr.bf16.mxu0 %v925
        %968 = vmatpush1.bf16.msra.mxu0 %v924
        %969 = vmatprep.subr.bf16.mxu0 %v928
        %970 = vmatpush1.bf16.msra.mxu0 %v927
        %971 = vmatprep.subr.bf16.mxu0 %v931
        %972 = vmatpush1.bf16.msra.mxu0 %v930
        %973 = vmatprep.subr.bf16.mxu0 0
        %974 = vmatpush1.bf16.msra.mxu0 0
        %975 = vmatprep.subr.bf16.mxu0 0
        %976 = vmatpush1.bf16.msra.mxu0 0
        %977 = vmatprep.subr.bf16.mxu0 0
        %978 = vmatpush1.bf16.msra.mxu0 0
        %979 = vmatprep.subr.bf16.mxu0 0
        %980 = vmatpush1.bf16.msra.mxu0 0
        %981 = vmatprep.subr.bf16.mxu0 0
        %982 = vmatpush1.bf16.msra.mxu0 0
        %983 = vmatprep.subr.bf16.mxu0 0
        %984 = vmatpush1.bf16.msra.mxu0 0
        %985 = vmatprep.subr.bf16.mxu0 0
        %986 = vmatpush1.bf16.msra.mxu0 0
        %987 = vmatprep.subr.bf16.mxu0 0
        %988 = vmatpush1.bf16.msra.mxu0 0
        %989 = vmatprep.mubr.bf16.mxu0 0
        %990 = vmatmul.mubr.bf16.gmra.mrb[0].mxu0 %v773
        %v991 = vpop.f32.mrb[0].mxu0
        %v992 = vadd.f32 %v817, %v991
        %v993 = vpop.f32.mrb[0].mxu0
        %v994 = vadd.f32 %v821, %v993
        %v995 = vpop.f32.mrb[0].mxu0
        %v996 = vadd.f32 %v817, %v995
        %v997 = vpop.f32.mrb[0].mxu0
        %v998 = vadd.f32 %v821, %v997
        %999 = vmatprep.mubr.bf16.mxu0 0
        %1000 = vmatmul.mubr.bf16.gmra.mrb[0].mxu0 %v774
        %v1001 = vpop.f32.mrb[0].mxu0
        %v1002 = vadd.f32 %v817, %v1001
        %v1003 = vpop.f32.mrb[0].mxu0
        %v1004 = vadd.f32 %v821, %v1003
        %v1005 = vpop.f32.mrb[0].mxu0
        %v1006 = vadd.f32 %v817, %v1005
        %v1007 = vpop.f32.mrb[0].mxu0
        %v1008 = vadd.f32 %v821, %v1007
        %1009 = vmatprep.mubr.bf16.mxu0 0
        %1010 = vmatmul.mubr.bf16.gmra.mrb[0].mxu0 %v775
        %v1011 = vpop.f32.mrb[0].mxu0
        %v1012 = vadd.f32 %v817, %v1011
        %v1013 = vpop.f32.mrb[0].mxu0
        %v1014 = vadd.f32 %v821, %v1013
        %v1015 = vpop.f32.mrb[0].mxu0
        %v1016 = vadd.f32 %v817, %v1015
        %v1017 = vpop.f32.mrb[0].mxu0
        %v1018 = vadd.f32 %v821, %v1017
        %1019 = vmatprep.mubr.bf16.mxu0 0
        %1020 = vmatmul.mubr.bf16.gmra.mrb[0].mxu0 %v776
        %v1021 = vpop.f32.mrb[0].mxu0
        %v1022 = vadd.f32 %v817, %v1021
        %v1023 = vpop.f32.mrb[0].mxu0
        %v1024 = vadd.f32 %v821, %v1023
        %v1025 = vpop.f32.mrb[0].mxu0
        %v1026 = vadd.f32 %v817, %v1025
        %v1027 = vpop.f32.mrb[0].mxu0
        %v1028 = vadd.f32 %v821, %v1027
        %1029 = vmatprep.mubr.bf16.mxu0 0
        %1030 = vmatmul.mubr.bf16.gmra.mrb[0].mxu0 %v777
        %v1031 = vpop.f32.mrb[0].mxu0
        %v1032 = vadd.f32 %v817, %v1031
        %v1033 = vpop.f32.mrb[0].mxu0
        %v1034 = vadd.f32 %v821, %v1033
        %v1035 = vpop.f32.mrb[0].mxu0
        %v1036 = vadd.f32 %v817, %v1035
        %v1037 = vpop.f32.mrb[0].mxu0
        %v1038 = vadd.f32 %v821, %v1037
        %1039 = vmatprep.mubr.bf16.mxu0 0
        %1040 = vmatmul.mubr.bf16.gmra.mrb[0].mxu0 %v778
        %v1041 = vpop.f32.mrb[0].mxu0
        %v1042 = vadd.f32 %v817, %v1041
        %v1043 = vpop.f32.mrb[0].mxu0
        %v1044 = vadd.f32 %v821, %v1043
        %v1045 = vpop.f32.mrb[0].mxu0
        %v1046 = vadd.f32 %v817, %v1045
        %v1047 = vpop.f32.mrb[0].mxu0
        %v1048 = vadd.f32 %v821, %v1047
        %1049 = vmatprep.mubr.bf16.mxu0 0
        %1050 = vmatmul.mubr.bf16.gmra.mrb[0].mxu0 %v779
        %v1051 = vpop.f32.mrb[0].mxu0
        %v1052 = vadd.f32 %v817, %v1051
        %v1053 = vpop.f32.mrb[0].mxu0
        %v1054 = vadd.f32 %v821, %v1053
        %v1055 = vpop.f32.mrb[0].mxu0
        %v1056 = vadd.f32 %v817, %v1055
        %v1057 = vpop.f32.mrb[0].mxu0
        %v1058 = vadd.f32 %v821, %v1057
        %1059 = vdwg.mxu0
        %1060 = vmatprep.subr.bf16.mxu0 0
        %1061 = vmatpush1.bf16.msra.mxu0 %v911
        %1062 = vmatprep.subr.bf16.mxu0 0
        %1063 = vmatpush1.bf16.msra.mxu0 %v914
        %1064 = vmatprep.subr.bf16.mxu0 0
        %1065 = vmatpush1.bf16.msra.mxu0 %v917
        %1066 = vmatprep.subr.bf16.mxu0 0
        %1067 = vmatpush1.bf16.msra.mxu0 %v920
        %1068 = vmatprep.subr.bf16.mxu0 0
        %1069 = vmatpush1.bf16.msra.mxu0 %v923
        %1070 = vmatprep.subr.bf16.mxu0 0
        %1071 = vmatpush1.bf16.msra.mxu0 %v926
        %1072 = vmatprep.subr.bf16.mxu0 0
        %1073 = vmatpush1.bf16.msra.mxu0 %v929
        %1074 = vmatprep.subr.bf16.mxu0 0
        %1075 = vmatpush1.bf16.msra.mxu0 %v932
        %1076 = vmatprep.subr.bf16.mxu0 0
        %1077 = vmatpush1.bf16.msra.mxu0 0
        %1078 = vmatprep.subr.bf16.mxu0 0
        %1079 = vmatpush1.bf16.msra.mxu0 0
        %1080 = vmatprep.subr.bf16.mxu0 0
        %1081 = vmatpush1.bf16.msra.mxu0 0
        %1082 = vmatprep.subr.bf16.mxu0 0
        %1083 = vmatpush1.bf16.msra.mxu0 0
        %1084 = vmatprep.subr.bf16.mxu0 0
        %1085 = vmatpush1.bf16.msra.mxu0 0
        %1086 = vmatprep.subr.bf16.mxu0 0
        %1087 = vmatpush1.bf16.msra.mxu0 0
        %1088 = vmatprep.subr.bf16.mxu0 0
        %1089 = vmatpush1.bf16.msra.mxu0 0
        %1090 = vmatprep.subr.bf16.mxu0 0
        %1091 = vmatpush1.bf16.msra.mxu0 0
        %1092 = vmatprep.mubr.bf16.mxu0 0
        %1093 = vmatmul.mubr.bf16.gmra.mrb[0].mxu0 %v773
        %v1094 = vpop.f32.mrb[0].mxu0
        %v1095 = vadd.f32 %v825, %v1094
        %v1096 = vpop.f32.mrb[0].mxu0
        %v1097 = vpop.f32.mrb[0].mxu0
        %v1098 = vadd.f32 %v825, %v1097
        %v1099 = vpop.f32.mrb[0].mxu0
        %1100 = vmatprep.mubr.bf16.mxu0 0
        %1101 = vmatmul.mubr.bf16.gmra.mrb[0].mxu0 %v774
        %v1102 = vpop.f32.mrb[0].mxu0
        %v1103 = vadd.f32 %v825, %v1102
        %v1104 = vpop.f32.mrb[0].mxu0
        %v1105 = vpop.f32.mrb[0].mxu0
        %v1106 = vadd.f32 %v825, %v1105
        %v1107 = vpop.f32.mrb[0].mxu0
        %1108 = vmatprep.mubr.bf16.mxu0 0
        %1109 = vmatmul.mubr.bf16.gmra.mrb[0].mxu0 %v775
        %v1110 = vpop.f32.mrb[0].mxu0
        %v1111 = vadd.f32 %v825, %v1110
        %v1112 = vpop.f32.mrb[0].mxu0
        %v1113 = vpop.f32.mrb[0].mxu0
        %v1114 = vadd.f32 %v825, %v1113
        %v1115 = vpop.f32.mrb[0].mxu0
        %1116 = vmatprep.mubr.bf16.mxu0 0
        %1117 = vmatmul.mubr.bf16.gmra.mrb[0].mxu0 %v776
        %v1118 = vpop.f32.mrb[0].mxu0
        %v1119 = vadd.f32 %v825, %v1118
        %v1120 = vpop.f32.mrb[0].mxu0
        %v1121 = vpop.f32.mrb[0].mxu0
        %v1122 = vadd.f32 %v825, %v1121
        %v1123 = vpop.f32.mrb[0].mxu0
        %1124 = vmatprep.mubr.bf16.mxu0 0
        %1125 = vmatmul.mubr.bf16.gmra.mrb[0].mxu0 %v777
        %v1126 = vpop.f32.mrb[0].mxu0
        %v1127 = vadd.f32 %v825, %v1126
        %v1128 = vpop.f32.mrb[0].mxu0
        %v1129 = vpop.f32.mrb[0].mxu0
        %v1130 = vadd.f32 %v825, %v1129
        %v1131 = vpop.f32.mrb[0].mxu0
        %1132 = vmatprep.mubr.bf16.mxu0 0
        %1133 = vmatmul.mubr.bf16.gmra.mrb[0].mxu0 %v778
        %v1134 = vpop.f32.mrb[0].mxu0
        %v1135 = vadd.f32 %v825, %v1134
        %v1136 = vpop.f32.mrb[0].mxu0
        %v1137 = vpop.f32.mrb[0].mxu0
        %v1138 = vadd.f32 %v825, %v1137
        %v1139 = vpop.f32.mrb[0].mxu0
        %1140 = vmatprep.mubr.bf16.mxu0 0
        %1141 = vmatmul.mubr.bf16.gmra.mrb[0].mxu0 %v779
        %v1142 = vpop.f32.mrb[0].mxu0
        %v1143 = vadd.f32 %v825, %v1142
        %v1144 = vpop.f32.mrb[0].mxu0
        %v1145 = vpop.f32.mrb[0].mxu0
        %v1146 = vadd.f32 %v825, %v1145
        %v1147 = vpop.f32.mrb[0].mxu0
        %1148 = vdwg.mxu0
        %1149 = vst [vmem:[%s250] sm:$0xff] %v992
        %1150 = vst [vmem:[%s250 + $0x8] sm:$0xff] %v994
        %1151 = vst.msk [vmem:[%s250 + $0x10] sm:$0xff] %vm485, %v1095
        %1152 = vst [vmem:[%s250 + $0x18] sm:$0xff] %v996
        %1153 = vst [vmem:[%s250 + $0x20] sm:$0xff] %v998
        %1154 = vst.msk [vmem:[%s250 + $0x28] sm:$0xff] %vm485, %v1098
        %1155 = vst [vmem:[%s250 + $0x30] sm:$0xff] %v1002
        %1156 = vst [vmem:[%s250 + $0x38] sm:$0xff] %v1004
        %1157 = vst.msk [vmem:[%s250 + $0x40] sm:$0xff] %vm485, %v1103
        %1158 = vst [vmem:[%s250 + $0x48] sm:$0xff] %v1006
        %1159 = vst [vmem:[%s250 + $0x50] sm:$0xff] %v1008
        %1160 = vst.msk [vmem:[%s250 + $0x58] sm:$0xff] %vm485, %v1106
        %1161 = vst [vmem:[%s250 + $0x60] sm:$0xff] %v1012
        %1162 = vst [vmem:[%s250 + $0x68] sm:$0xff] %v1014
        %1163 = vst.msk [vmem:[%s250 + $0x70] sm:$0xff] %vm485, %v1111
        %1164 = vst [vmem:[%s250 + $0x78] sm:$0xff] %v1016
        %1165 = vst [vmem:[%s250 + $0x80] sm:$0xff] %v1018
        %1166 = vst.msk [vmem:[%s250 + $0x88] sm:$0xff] %vm485, %v1114
        %1167 = vst [vmem:[%s250 + $0x90] sm:$0xff] %v1022
        %1168 = vst [vmem:[%s250 + $0x98] sm:$0xff] %v1024
        %1169 = vst.msk [vmem:[%s250 + $0xa0] sm:$0xff] %vm485, %v1119
        %1170 = vst [vmem:[%s250 + $0xa8] sm:$0xff] %v1026
        %1171 = vst [vmem:[%s250 + $0xb0] sm:$0xff] %v1028
        %1172 = vst.msk [vmem:[%s250 + $0xb8] sm:$0xff] %vm485, %v1122
        %1173 = vst [vmem:[%s250 + $0xc0] sm:$0xff] %v1032
        %1174 = vst [vmem:[%s250 + $0xc8] sm:$0xff] %v1034
        %1175 = vst.msk [vmem:[%s250 + $0xd0] sm:$0xff] %vm485, %v1127
        %1176 = vst [vmem:[%s250 + $0xd8] sm:$0xff] %v1036
        %1177 = vst [vmem:[%s250 + $0xe0] sm:$0xff] %v1038
        %1178 = vst.msk [vmem:[%s250 + $0xe8] sm:$0xff] %vm485, %v1130
        %1179 = vst [vmem:[%s250 + $0xf0] sm:$0xff] %v1042
        %1180 = vst [vmem:[%s250 + $0xf8] sm:$0xff] %v1044
        %1181 = vst.msk [vmem:[%s250 + $0x100] sm:$0xff] %vm485, %v1135
        %1182 = vst [vmem:[%s250 + $0x108] sm:$0xff] %v1046
        %1183 = vst [vmem:[%s250 + $0x110] sm:$0xff] %v1048
        %1184 = vst.msk [vmem:[%s250 + $0x118] sm:$0xff] %vm485, %v1138
        %1185 = vst [vmem:[%s250 + $0x120] sm:$0xff] %v1052
        %1186 = vst [vmem:[%s250 + $0x128] sm:$0xff] %v1054
        %1187 = vst.msk [vmem:[%s250 + $0x130] sm:$0xff] %vm485, %v1143
        %1188 = vst [vmem:[%s250 + $0x138] sm:$0xff] %v1056
        %1189 = vst [vmem:[%s250 + $0x140] sm:$0xff] %v1058
        %1190 = vst.msk [vmem:[%s250 + $0x148] sm:$0xff] %vm485, %v1146
        %s1191 = sand.u32 %s140, 1
        %s1192 = scalar_lea.sflag [#allocation4], %s1191
        %s1193 = sand.u32 %s140, 1
        %s1194 = smul.addr %s1193, 336
        %s1195 = scalar_lea.vmem [#allocation5], %s1194
        // Predicated region
        $region45: #{tpu_custom_call.1} parent=39 // pred_check
          %p1196 = pneg %p150
        $region46: #{tpu_custom_call.1} parent=39 // pred_check_branch
          %1198 = sbr.rel (%p1196) target = $region48
        $region47: #{tpu_custom_call.1} parent=39 // pred_region
          %s1199 = smul.u32 14, %s22
          %s1200 = ssub.s32 25, %s1199
          %p1201 = scmp.lt.s32.totalorder %s1200, 14
          %s1202 = scalar_select %p1201, %s1200, 14
          %s1203 = smul.u32 128, %s1202
          %s1204 = smul.u32 %s1203, 3
          %s1206 = ssub.s32 5376, %s1204
          %1207 = vsyncadd %s1192, %s1206
          %p1208 = scmp.ne.s32.totalorder 0, %s1204
          %s1209 = smul.addr %s1199, 3
          %s1210 = smul.addr %s1209, 128
          %s1211 = scalar_lea.hbm %s5, %s1210
          %s1212 = smul.u32 24, %s1202
          %s1213 = sshll.u32 %s1195, 4
          %s1214 = int_to_ptr.vmem [resolvable:$true] %s1213
          %s1215 = sshll.u32 %s1212, 4
          %1219 = dma.vmem_to_hbm [thread:$0]  (%p1208), %s1214, %s1215, %s1211, %s1192, 384, 384, 24
        $region48: #{tpu_custom_call.1} parent=39 // pred_fallthru
          _
      $region40: #{tpu_custom_call.1} parent=5 // pred_fallthru
        _
      %p1220 = scmp.le.s32.totalorder 2, %s17
      // Predicated region
      $region49: #{tpu_custom_call.1} parent=5 // pred_check
        %p1221 = pneg %p1220
      $region50: #{tpu_custom_call.1} parent=5 // pred_check_branch
        %1223 = sbr.rel (%p1221) target = $region52
      $region51: #{tpu_custom_call.1} parent=5 // pred_region
        %s1224 = ssub.s32 %s17, 2
        // Predicated region
        $region53: #{tpu_custom_call.1} parent=51 // pred_check
          %p1225 = pneg %p156
        $region54: #{tpu_custom_call.1} parent=51 // pred_check_branch
          %1227 = sbr.rel (%p1225) target = $region56
        $region55: #{tpu_custom_call.1} parent=51 // pred_region
          %s1228 = sand.u32 %s141, 1
          %s1229 = scalar_lea.sflag [#allocation4], %s1228
          %s1230 = sand.u32 %s141, 1
          %s1231 = smul.addr %s1230, 336
          %s1232 = scalar_lea.vmem [#allocation5], %s1231
          %1233 = dma.done %s1229, 5376
        $region56: #{tpu_custom_call.1} parent=51 // pred_fallthru
          _
      $region52: #{tpu_custom_call.1} parent=5 // pred_fallthru
        _
    $region6: #{tpu_custom_call.1} parent=1 // loop_footer
      %s21 = sadd.s32 1, %s17
    $region7: #{tpu_custom_call.1} parent=1 // loop_footer_branch
      %16 = sbr.rel target = $region3
    $region8: #{tpu_custom_call.1} parent=1 // loop_exit
      _
    %1234 = vsyncpa [#allocation3], 1
    %s1235 = scalar_lea.sflag [#allocation3], 1
    %1236 = vsyncpa %s1235, 1
    %1237 = vsyncpa [#allocation4], 1
    %s1238 = scalar_lea.sflag [#allocation4], 1
    %1239 = vsyncpa %s1238, 1

</llo_original>
